<compile_context>
chip_gen: v6e
topology: v6e:2x2x1
jax: 0.10.0
libtpu: 0.0.40
codegen_flags: <defaults>
</compile_context>

<pallas_src>
import jax
import jax.numpy as jnp
from jax.experimental import pallas as pl
from jax.experimental.pallas import tpu as pltpu

N_STEPS = 2  # hard-coded in the PyTorch forward


# --------------------------------------------------------------------------
# Kernel
# --------------------------------------------------------------------------
def _structure_kernel(fa_ref, fo_ref, fs_ref, wua_ref, w2a_ref, w2b_ref,
                      wi_ref, wh_ref, bi_ref, bh_ref, wc_ref,
                      hi_ref, oin_ref, gi_ref, gh_ref):
    NB, NI = fo_ref.shape
    tk, H3 = wi_ref.shape
    H = H3 // 3
    nk = NI // tk                      # static number of K tiles

    s = pl.program_id(0)               # structure-inference step
    k = pl.program_id(1)               # K tile of the GRU contraction axis

    # ---- one-time init: hi <- fo, oinput <- broadcast(whole-image feature) ----
    @pl.when((s == 0) & (k == 0))
    def _init():
        hi_ref[...] = fo_ref[...]
        oin_ref[...] = jnp.broadcast_to(fs_ref[...], (NB, NI))

    # ---- per-step prologue (k == 0): row-0 attention + new oinput ----
    @pl.when(k == 0)
    def _attention():
        hi = hi_ref[...]
        # PA[0] = relu(fa[0] . weight_ua); only row 0 of PA is ever consumed.
        pa0 = jnp.maximum(
            jnp.sum(fa_ref[0:1, :] * wua_ref[...], axis=1, keepdims=True), 0.0)
        # A0[j] = PA[0] * tanh(hi[0].w2a + oinput[j].w2b)
        s0 = jnp.sum(hi[0:1, :] * w2a_ref[...], axis=1, keepdims=True)    # [1,1]
        q = jnp.sum(oin_ref[...] * w2b_ref[...], axis=1, keepdims=True)   # [NB,1]
        a0 = pa0 * jnp.tanh(s0 + q)                                       # [NB,1]
        # softmax over j (sublane axis), f32
        a0 = a0 - jnp.max(a0, axis=0, keepdims=True)
        e = jnp.exp(a0)
        z0 = e / jnp.sum(e, axis=0, keepdims=True)                        # [NB,1]
        # oinput[j,:] = Z[0,j] * hi[j,:]  -- pure VPU broadcast multiply.
        oin_ref[...] = z0 * hi
        gi_ref[...] = jnp.zeros_like(gi_ref)
        gh_ref[...] = jnp.zeros_like(gh_ref)

    # ---- GRU gate matmuls, K-tiled (minimal 6*NI*H weights, no concat) ----
    if nk == 1:
        oin_k = oin_ref[...]
        hi_k = hi_ref[...]
    else:
        ks = pl.multiple_of(k * tk, tk)
        oin_k = oin_ref[:, pl.ds(ks, tk)]
        hi_k = hi_ref[:, pl.ds(ks, tk)]
    gi_ref[...] += jnp.dot(oin_k.astype(wi_ref.dtype), wi_ref[...],
                           preferred_element_type=jnp.float32)
    gh_ref[...] += jnp.dot(hi_k.astype(wh_ref.dtype), wh_ref[...],
                           preferred_element_type=jnp.float32)

    # ---- per-step epilogue (k == last): gates, confusion scale, residual, relu ----
    @pl.when(k == nk - 1)
    def _update():
        hi = hi_ref[...]                                   # residual (old hi)
        gi = gi_ref[...] + bi_ref[...]
        gh = gh_ref[...] + bh_ref[...]
        r = jax.nn.sigmoid(gi[:, 0:H] + gh[:, 0:H])
        z = jax.nn.sigmoid(gi[:, H:2 * H] + gh[:, H:2 * H])
        n = jnp.tanh(gi[:, 2 * H:3 * H] + r * gh[:, 2 * H:3 * H])
        hi1 = (1.0 - z) * n + z * hi
        hi_ref[...] = jnp.maximum(hi1 * wc_ref[...] + hi, 0.0)


# --------------------------------------------------------------------------
# Wrapper helpers
# --------------------------------------------------------------------------
def _vmem_capacity_bytes():
    try:
        return int(pltpu.get_tpu_info().vmem_capacity_bytes)
    except Exception:
        return 64 * 2**20          # conservative (v7x per-TC) fallback


def _choose_k_tile(NI, H3, capacity, weight_itemsize):
    """Largest K tile such that wi+wh tiles (double-buffered) fit a VMEM budget."""
    resident = 2 * NI * H3 * weight_itemsize
    budget = int(0.4 * capacity)
    if resident <= budget:
        return NI                  # weights resident; streamed from HBM once
    for tk in range(NI, 0, -128):
        if NI % tk == 0 and 2 * (2 * tk * H3 * weight_itemsize) <= budget:
            return tk
    return 128 if NI % 128 == 0 else NI


def _vmem_limit_bytes(NB, NI, H3, tk, capacity, weight_itemsize):
    f32 = 4
    weights = 2 * (2 * tk * H3 * weight_itemsize)          # wi+wh, double-buffered
    small = 2 * (NB * 9 + NB * NI + NI + 9 + 2 * NI + 2 * H3 + 1) * f32
    scratch = (NB * NI + 2 * NB * H3) * f32
    out = 2 * NB * NI * f32
    need = weights + small + scratch + out + (4 << 20)
    return int(min(max(32 << 20, need), max(32 << 20, capacity - (4 << 20))))


def pack_structure_params(params, weight_dtype=jnp.bfloat16):
    """One-time parameter packing (call at model init, NOT per forward).

    Minimal 6*NI*H GRU weight layout: wi = w_ih^T, wh = w_hh^T (gate order
    r,z,n preserved).  bf16 weights are MXU-native; use weight_dtype=float32
    for exact parity with the PyTorch module at 2x the HBM/VMEM cost.
    """
    NI = int(params['n_inputs'])
    H3 = 3 * NI
    w2 = jnp.asarray(params['concat_w2'], jnp.float32).reshape(2 * NI)
    return {
        'n_inputs': NI,
        'wi': jnp.asarray(params['w_ih'], jnp.float32).T.astype(weight_dtype),  # [NI,3H]
        'wh': jnp.asarray(params['w_hh'], jnp.float32).T.astype(weight_dtype),  # [NI,3H]
        'bi': jnp.asarray(params['b_ih'], jnp.float32).reshape(1, H3),
        'bh': jnp.asarray(params['b_hh'], jnp.float32).reshape(1, H3),
        'wua': jnp.asarray(params['weight_ua'], jnp.float32).reshape(1, 9),
        'w2a': w2[:NI].reshape(1, NI),   # Concat_w2 half applied to hi
        'w2b': w2[NI:].reshape(1, NI),   # Concat_w2 half applied to oinput
        'wc': jnp.asarray(params['weight_confusion'], jnp.float32).reshape(1, 1),
    }


def structure_inference_forward(edges_all, rois, whole, boxes, packed):
    """Pallas forward.  `packed` comes from pack_structure_params (one-time)."""
    NB = int(boxes)
    NI = int(packed['n_inputs'])
    H3 = 3 * NI

    fa = jnp.asarray(edges_all, jnp.float32).reshape(NB, 9)
    fo = jnp.asarray(rois, jnp.float32).reshape(NB, NI)
    fs = jnp.asarray(whole, jnp.float32).reshape(1, NI)

    w_itemsize = jnp.dtype(packed['wi'].dtype).itemsize
    capacity = _vmem_capacity_bytes()
    tk = _choose_k_tile(NI, H3, capacity, w_itemsize)
    nk = NI // tk

    def const(shape):
        return pl.BlockSpec(shape, lambda s, k: (0, 0))

    in_specs = [
        const((NB, 9)),                                   # fa
        const((NB, NI)),                                  # fo (rois)
        const((1, NI)),                                   # fs (whole)
        const((1, 9)),                                    # weight_ua
        const((1, NI)),                                   # concat_w2 (hi half)
        const((1, NI)),                                   # concat_w2 (oinput half)
        pl.BlockSpec((tk, H3), lambda s, k: (k, 0)),      # w_ih^T, K-tiled
        pl.BlockSpec((tk, H3), lambda s, k: (k, 0)),      # w_hh^T, K-tiled
        const((1, H3)),                                   # b_ih
        const((1, H3)),                                   # b_hh
        const((1, 1)),                                    # weight_confusion
    ]
    out_specs = const((NB, NI))
    scratch = [
        pltpu.VMEM((NB, NI), jnp.float32),                # oinput state
        pltpu.VMEM((NB, H3), jnp.float32),                # gi accumulator
        pltpu.VMEM((NB, H3), jnp.float32),                # gh accumulator
    ]

    weight_bytes = 2 * NI * H3 * w_itemsize
    cost = pl.CostEstimate(
        flops=int(2 * N_STEPS * 2 * NB * NI * H3),
        transcendentals=int(N_STEPS * NB * (3 * NI + 2)),
        bytes_accessed=int(weight_bytes * (1 if nk == 1 else N_STEPS)
                           + (2 * NB * NI + 4 * NI + 2 * H3 + NB * 9) * 4),
    )

    return pl.pallas_call(
        _structure_kernel,
        out_shape=jax.ShapeDtypeStruct((NB, NI), jnp.float32),
        grid=(N_STEPS, nk),
        in_specs=in_specs,
        out_specs=out_specs,
        scratch_shapes=scratch,
        compiler_params=pltpu.CompilerParams(
            dimension_semantics=("arbitrary", "arbitrary"),
            vmem_limit_bytes=_vmem_limit_bytes(NB, NI, H3, tk, capacity,
                                               w_itemsize)),
        cost_estimate=cost,
    )(fa, fo, fs, packed['wua'], packed['w2a'], packed['w2b'],
      packed['wi'], packed['wh'], packed['bi'], packed['bh'], packed['wc'])


# --------------------------------------------------------------------------
# Pure-JAX reference (literal transcription of the PyTorch forward)
# --------------------------------------------------------------------------
def reference_forward(edges_all, rois, whole, boxes, params):
    NB = boxes
    NI = params['n_inputs']
    H = NI
    fo = rois.reshape(NB, NI)
    fs = whole.reshape(1, NI)
    fs = jnp.concatenate([fs] * NB, axis=0).reshape(NB, 1, NI)
    fa = edges_all.reshape(NB, 9)
    PA = jax.nn.relu(fa @ params['weight_ua']).reshape(NB, 1)
    oinput = fs[:, 0, :]
    hi = fo
    for _ in range(N_STEPS):
        residual = hi
        X = jnp.concatenate([hi] * NB, 0).reshape(NB * NB, NI)
        Y1 = jnp.concatenate([hi] * NB, 1).reshape(NB * NB, NI)
        Y2 = jnp.concatenate([oinput] * NB, 0).reshape(NB * NB, NI)
        VA = jnp.concatenate([Y1, Y2], 1) @ params['concat_w2']
        VA = jnp.tanh(VA.reshape(NB, NB))
        A = PA * VA
        Z = jax.nn.softmax(A, axis=1)
        X = X.reshape(NB, NB, NI)
        M = Z.reshape(NB, NB, 1) * X
        me_max = M[0].reshape(NB, 1, NI)
        oinput = me_max[:, 0, :]
        gi = oinput @ params['w_ih'].T + params['b_ih']
        gh = hi @ params['w_hh'].T + params['b_hh']
        r = jax.nn.sigmoid(gi[:, :H] + gh[:, :H])
        z = jax.nn.sigmoid(gi[:, H:2 * H] + gh[:, H:2 * H])
        n = jnp.tanh(gi[:, 2 * H:] + r * gh[:, 2 * H:])
        hi1 = (1.0 - z) * n + z * hi
        hi = hi1 * params['weight_confusion'][0]
        hi = hi + residual
        hi = jax.nn.relu(hi)
    return hi


if __name__ == "__main__":
    NB = 8      # n_boxes
    NI = 128    # n_inputs == n_hidden_o (GRU hidden size); 2048 in production
    H = NI

    key = jax.random.PRNGKey(0)
    keys = jax.random.split(key, 10)
    k_gru = 1.0 / jnp.sqrt(jnp.float32(H))

    params = {
        'n_inputs': NI,
        'weight_ua': jax.random.normal(keys[0], (9, 1), dtype=jnp.float32) * 0.1,
        'concat_w2': jax.random.normal(keys[1], (2 * NI, 1), dtype=jnp.float32) * 0.05,
        'w_ih': jax.random.uniform(keys[2], (3 * H, NI), minval=-k_gru, maxval=k_gru,
                                   dtype=jnp.float32),
        'w_hh': jax.random.uniform(keys[3], (3 * H, H), minval=-k_gru, maxval=k_gru,
                                   dtype=jnp.float32),
        'b_ih': jax.random.uniform(keys[4], (3 * H,), minval=-k_gru, maxval=k_gru,
                                   dtype=jnp.float32),
        'b_hh': jax.random.uniform(keys[5], (3 * H,), minval=-k_gru, maxval=k_gru,
                                   dtype=jnp.float32),
        'weight_confusion': jnp.array([0.5], dtype=jnp.float32),
    }

    edges_all = jax.random.normal(keys[6], (NB, 9), dtype=jnp.float32)
    rois = jax.random.normal(keys[7], (NB, NI), dtype=jnp.float32)
    whole = jax.random.normal(keys[8], (1, NI), dtype=jnp.float32)

    # One-time weight packing (kept out of the per-forward path).
    packed = jax.tree_util.tree_map(jax.block_until_ready,
                                    pack_structure_params(params))

    out = structure_inference_forward(edges_all, rois, whole, NB, packed)
    out = jax.block_until_ready(out)

    ref = reference_forward(edges_all, rois, whole, NB, params)
    assert out.shape == (NB, NI)
    max_err = float(jnp.max(jnp.abs(out - ref)))
    assert jnp.allclose(out, ref, atol=5e-2, rtol=5e-2), max_err

    # TODO(synk): if the surrounding detector processes a batch of images,
    # stack them into the matmul M dimension (M = B*NB) in one pallas_call to
    # amortize the weight stream (the kernel is weight-DMA bound at M=8).

    print("KERNEL_OK")
</pallas_src>

<mosaic_0001>
module attributes {stable_mosaic.version = 11 : i64} {
  func.func @_structure_kernel(%arg0: i32, %arg1: i32, %arg2: memref<8x9xf32, #tpu.memory_space<vmem>>, %arg3: memref<8x128xf32, #tpu.memory_space<vmem>>, %arg4: memref<1x128xf32, #tpu.memory_space<vmem>>, %arg5: memref<1x9xf32, #tpu.memory_space<vmem>>, %arg6: memref<1x128xf32, #tpu.memory_space<vmem>>, %arg7: memref<1x128xf32, #tpu.memory_space<vmem>>, %arg8: memref<128x384xbf16, #tpu.memory_space<vmem>>, %arg9: memref<128x384xbf16, #tpu.memory_space<vmem>>, %arg10: memref<1x384xf32, #tpu.memory_space<vmem>>, %arg11: memref<1x384xf32, #tpu.memory_space<vmem>>, %arg12: memref<1x1xf32, #tpu.memory_space<vmem>>, %arg13: memref<8x128xf32, #tpu.memory_space<vmem>>, %arg14: memref<8x128xf32, #tpu.memory_space<vmem>>, %arg15: memref<8x384xf32, #tpu.memory_space<vmem>>, %arg16: memref<8x384xf32, #tpu.memory_space<vmem>>) attributes {dimension_semantics = [#tpu.dimension_semantics<arbitrary>, #tpu.dimension_semantics<arbitrary>], iteration_bounds = array<i64: 2, 1>, scalar_prefetch = 0 : i64, scratch_operands = 3 : i64, tpu.core_type = #tpu.core_type<tc>, window_params = [{pipeline_mode = #tpu.pipeline_mode<synchronous>, transform_indices = @transform_0, window_bounds = array<i64: 8, 9>}, {pipeline_mode = #tpu.pipeline_mode<synchronous>, transform_indices = @transform_1, window_bounds = array<i64: 8, 128>}, {pipeline_mode = #tpu.pipeline_mode<synchronous>, transform_indices = @transform_2, window_bounds = array<i64: 1, 128>}, {pipeline_mode = #tpu.pipeline_mode<synchronous>, transform_indices = @transform_3, window_bounds = array<i64: 1, 9>}, {pipeline_mode = #tpu.pipeline_mode<synchronous>, transform_indices = @transform_4, window_bounds = array<i64: 1, 128>}, {pipeline_mode = #tpu.pipeline_mode<synchronous>, transform_indices = @transform_5, window_bounds = array<i64: 1, 128>}, {transform_indices = @transform_6, window_bounds = array<i64: 128, 384>}, {transform_indices = @transform_7, window_bounds = array<i64: 128, 384>}, {pipeline_mode = #tpu.pipeline_mode<synchronous>, transform_indices = @transform_8, window_bounds = array<i64: 1, 384>}, {pipeline_mode = #tpu.pipeline_mode<synchronous>, transform_indices = @transform_9, window_bounds = array<i64: 1, 384>}, {pipeline_mode = #tpu.pipeline_mode<synchronous>, transform_indices = @transform_10, window_bounds = array<i64: 1, 1>}, {pipeline_mode = #tpu.pipeline_mode<synchronous>, transform_indices = @transform_11, window_bounds = array<i64: 8, 128>}]} {
    %c0_i32 = arith.constant 0 : i32
    %0 = arith.cmpi eq, %arg0, %c0_i32 : i32
    %c0_i32_0 = arith.constant 0 : i32
    %1 = arith.cmpi eq, %arg1, %c0_i32_0 : i32
    %2 = arith.andi %0, %1 : i1
    %3 = arith.extui %2 : i1 to i32
    %c0_i32_1 = arith.constant 0 : i32
    %4 = arith.cmpi ne, %3, %c0_i32_1 : i32
    scf.if %4 {
      %c0_22 = arith.constant 0 : index
      %c0_23 = arith.constant 0 : index
      %25 = vector.load %arg3[%c0_22, %c0_23] : memref<8x128xf32, #tpu.memory_space<vmem>>, vector<8x128xf32>
      %c0_24 = arith.constant 0 : index
      %c0_25 = arith.constant 0 : index
      %26 = vector.load %arg13[%c0_24, %c0_25] : memref<8x128xf32, #tpu.memory_space<vmem>>, vector<8x128xf32>
      tpu.vector_store %arg13[%c0_24, %c0_25], %25 {strides = array<i32>} : memref<8x128xf32, #tpu.memory_space<vmem>>, vector<8x128xf32>,
      %c0_26 = arith.constant 0 : index
      %c0_27 = arith.constant 0 : index
      %27 = vector.load %arg4[%c0_26, %c0_27] : memref<1x128xf32, #tpu.memory_space<vmem>>, vector<1x128xf32>
      %28 = vector.shape_cast %27 : vector<1x128xf32> to vector<1x128xf32>
      %29 = vector.broadcast %28 : vector<1x128xf32> to vector<8x128xf32>
      %c0_28 = arith.constant 0 : index
      %c0_29 = arith.constant 0 : index
      %30 = vector.load %arg14[%c0_28, %c0_29] : memref<8x128xf32, #tpu.memory_space<vmem>>, vector<8x128xf32>
      tpu.vector_store %arg14[%c0_28, %c0_29], %29 {strides = array<i32>} : memref<8x128xf32, #tpu.memory_space<vmem>>, vector<8x128xf32>,
    } else {
    }
    %c0_i32_2 = arith.constant 0 : i32
    %5 = arith.cmpi eq, %arg1, %c0_i32_2 : i32
    %6 = arith.extui %5 : i1 to i32
    %c0_i32_3 = arith.constant 0 : i32
    %7 = arith.cmpi ne, %6, %c0_i32_3 : i32
    scf.if %7 {
      %c0_22 = arith.constant 0 : index
      %c0_23 = arith.constant 0 : index
      %25 = vector.load %arg13[%c0_22, %c0_23] : memref<8x128xf32, #tpu.memory_space<vmem>>, vector<8x128xf32>
      %c0_24 = arith.constant 0 : index
      %c0_25 = arith.constant 0 : index
      %26 = vector.load %arg2[%c0_24, %c0_25] : memref<8x9xf32, #tpu.memory_space<vmem>>, vector<1x9xf32>
      %c0_26 = arith.constant 0 : index
      %c0_27 = arith.constant 0 : index
      %27 = vector.load %arg5[%c0_26, %c0_27] : memref<1x9xf32, #tpu.memory_space<vmem>>, vector<1x9xf32>
      %28 = arith.mulf %26, %27 : vector<1x9xf32>
      %cst_28 = arith.constant dense<0.000000e+00> : vector<1xf32>
      %29 = vector.multi_reduction <add>, %28, %cst_28 [1] : vector<1x9xf32> to vector<1xf32>
      %30 = vector.shape_cast %29 : vector<1xf32> to vector<1x1xf32>
      %cst_29 = arith.constant 0.000000e+00 : f32
      %31 = vector.broadcast %cst_29 : f32 to vector<1x1xf32>
      %32 = arith.maximumf %30, %31 : vector<1x1xf32>
      %33 = vector.extract_strided_slice %25 {offsets = [0, 0], sizes = [1, 128], strides = [1, 1]} : vector<8x128xf32> to vector<1x128xf32>
      %c0_30 = arith.constant 0 : index
      %c0_31 = arith.constant 0 : index
      %34 = vector.load %arg6[%c0_30, %c0_31] : memref<1x128xf32, #tpu.memory_space<vmem>>, vector<1x128xf32>
      %35 = arith.mulf %33, %34 : vector<1x128xf32>
      %cst_32 = arith.constant dense<0.000000e+00> : vector<1xf32>
      %36 = vector.multi_reduction <add>, %35, %cst_32 [1] : vector<1x128xf32> to vector<1xf32>
      %37 = vector.shape_cast %36 : vector<1xf32> to vector<1x1xf32>
      %c0_33 = arith.constant 0 : index
      %c0_34 = arith.constant 0 : index
      %38 = vector.load %arg14[%c0_33, %c0_34] : memref<8x128xf32, #tpu.memory_space<vmem>>, vector<8x128xf32>
      %c0_35 = arith.constant 0 : index
      %c0_36 = arith.constant 0 : index
      %39 = vector.load %arg7[%c0_35, %c0_36] : memref<1x128xf32, #tpu.memory_space<vmem>>, vector<1x128xf32>
      %40 = vector.broadcast %39 : vector<1x128xf32> to vector<8x128xf32>
      %41 = arith.mulf %38, %40 : vector<8x128xf32>
      %cst_37 = arith.constant dense<0.000000e+00> : vector<8xf32>
      %42 = vector.multi_reduction <add>, %41, %cst_37 [1] : vector<8x128xf32> to vector<8xf32>
      %43 = vector.shape_cast %42 : vector<8xf32> to vector<8x1xf32>
      %44 = vector.broadcast %37 : vector<1x1xf32> to vector<8x1xf32>
      %45 = arith.addf %44, %43 : vector<8x1xf32>
      %46 = math.tanh %45 : vector<8x1xf32>
      %47 = vector.broadcast %32 : vector<1x1xf32> to vector<8x1xf32>
      %48 = arith.mulf %47, %46 : vector<8x1xf32>
      %cst_38 = arith.constant dense<0xFF800000> : vector<1xf32>
      %49 = vector.multi_reduction <maximumf>, %48, %cst_38 [0] : vector<8x1xf32> to vector<1xf32>
      %50 = vector.shape_cast %49 : vector<1xf32> to vector<1x1xf32>
      %51 = vector.broadcast %50 : vector<1x1xf32> to vector<8x1xf32>
      %52 = arith.subf %48, %51 : vector<8x1xf32>
      %53 = math.exp %52 : vector<8x1xf32>
      %cst_39 = arith.constant dense<0.000000e+00> : vector<1xf32>
      %54 = vector.multi_reduction <add>, %53, %cst_39 [0] : vector<8x1xf32> to vector<1xf32>
      %55 = vector.shape_cast %54 : vector<1xf32> to vector<1x1xf32>
      %56 = vector.broadcast %55 : vector<1x1xf32> to vector<8x1xf32>
      %57 = arith.divf %53, %56 : vector<8x1xf32>
      %58 = vector.broadcast %57 : vector<8x1xf32> to vector<8x128xf32>
      %59 = arith.mulf %58, %25 : vector<8x128xf32>
      %c0_40 = arith.constant 0 : index
      %c0_41 = arith.constant 0 : index
      %60 = vector.load %arg14[%c0_40, %c0_41] : memref<8x128xf32, #tpu.memory_space<vmem>>, vector<8x128xf32>
      tpu.vector_store %arg14[%c0_40, %c0_41], %59 {strides = array<i32>} : memref<8x128xf32, #tpu.memory_space<vmem>>, vector<8x128xf32>,
      %cst_42 = arith.constant 0.000000e+00 : f32
      %61 = vector.broadcast %cst_42 : f32 to vector<8x384xf32>
      %c0_43 = arith.constant 0 : index
      %c0_44 = arith.constant 0 : index
      %62 = vector.load %arg15[%c0_43, %c0_44] : memref<8x384xf32, #tpu.memory_space<vmem>>, vector<8x384xf32>
      tpu.vector_store %arg15[%c0_43, %c0_44], %61 {strides = array<i32>} : memref<8x384xf32, #tpu.memory_space<vmem>>, vector<8x384xf32>,
      %cst_45 = arith.constant 0.000000e+00 : f32
      %63 = vector.broadcast %cst_45 : f32 to vector<8x384xf32>
      %c0_46 = arith.constant 0 : index
      %c0_47 = arith.constant 0 : index
      %64 = vector.load %arg16[%c0_46, %c0_47] : memref<8x384xf32, #tpu.memory_space<vmem>>, vector<8x384xf32>
      tpu.vector_store %arg16[%c0_46, %c0_47], %63 {strides = array<i32>} : memref<8x384xf32, #tpu.memory_space<vmem>>, vector<8x384xf32>,
    } else {
    }
    %c0 = arith.constant 0 : index
    %c0_4 = arith.constant 0 : index
    %8 = vector.load %arg14[%c0, %c0_4] : memref<8x128xf32, #tpu.memory_space<vmem>>, vector<8x128xf32>
    %c0_5 = arith.constant 0 : index
    %c0_6 = arith.constant 0 : index
    %9 = vector.load %arg13[%c0_5, %c0_6] : memref<8x128xf32, #tpu.memory_space<vmem>>, vector<8x128xf32>
    %c0_7 = arith.constant 0 : index
    %c0_8 = arith.constant 0 : index
    %10 = vector.load %arg15[%c0_7, %c0_8] : memref<8x384xf32, #tpu.memory_space<vmem>>, vector<8x384xf32>
    %11 = arith.truncf %8 : vector<8x128xf32> to vector<8x128xbf16>
    %c0_9 = arith.constant 0 : index
    %c0_10 = arith.constant 0 : index
    %12 = vector.load %arg8[%c0_9, %c0_10] : memref<128x384xbf16, #tpu.memory_space<vmem>>, vector<128x384xbf16>
    %cst = arith.constant dense<0.000000e+00> : vector<8x384xf32>
    %13 = tpu.matmul %11, %12, %cst {dimension_numbers = #tpu.dot_dimension_numbers<[1], [0], [0], [1], [0, 0, 1, 1], [], []>} : vector<8x128xbf16>, vector<128x384xbf16>, vector<8x384xf32> -> vector<8x384xf32>
    %14 = arith.addf %10, %13 : vector<8x384xf32>
    %c0_11 = arith.constant 0 : index
    %c0_12 = arith.constant 0 : index
    %15 = vector.load %arg15[%c0_11, %c0_12] : memref<8x384xf32, #tpu.memory_space<vmem>>, vector<8x384xf32>
    tpu.vector_store %arg15[%c0_11, %c0_12], %14 {strides = array<i32>} : memref<8x384xf32, #tpu.memory_space<vmem>>, vector<8x384xf32>,
    %c0_13 = arith.constant 0 : index
    %c0_14 = arith.constant 0 : index
    %16 = vector.load %arg16[%c0_13, %c0_14] : memref<8x384xf32, #tpu.memory_space<vmem>>, vector<8x384xf32>
    %17 = arith.truncf %9 : vector<8x128xf32> to vector<8x128xbf16>
    %c0_15 = arith.constant 0 : index
    %c0_16 = arith.constant 0 : index
    %18 = vector.load %arg9[%c0_15, %c0_16] : memref<128x384xbf16, #tpu.memory_space<vmem>>, vector<128x384xbf16>
    %cst_17 = arith.constant dense<0.000000e+00> : vector<8x384xf32>
    %19 = tpu.matmul %17, %18, %cst_17 {dimension_numbers = #tpu.dot_dimension_numbers<[1], [0], [0], [1], [0, 0, 1, 1], [], []>} : vector<8x128xbf16>, vector<128x384xbf16>, vector<8x384xf32> -> vector<8x384xf32>
    %20 = arith.addf %16, %19 : vector<8x384xf32>
    %c0_18 = arith.constant 0 : index
    %c0_19 = arith.constant 0 : index
    %21 = vector.load %arg16[%c0_18, %c0_19] : memref<8x384xf32, #tpu.memory_space<vmem>>, vector<8x384xf32>
    tpu.vector_store %arg16[%c0_18, %c0_19], %20 {strides = array<i32>} : memref<8x384xf32, #tpu.memory_space<vmem>>, vector<8x384xf32>,
    %c0_i32_20 = arith.constant 0 : i32
    %22 = arith.cmpi eq, %arg1, %c0_i32_20 : i32
    %23 = arith.extui %22 : i1 to i32
    %c0_i32_21 = arith.constant 0 : i32
    %24 = arith.cmpi ne, %23, %c0_i32_21 : i32
    scf.if %24 {
      %c0_22 = arith.constant 0 : index
      %c0_23 = arith.constant 0 : index
      %25 = vector.load %arg13[%c0_22, %c0_23] : memref<8x128xf32, #tpu.memory_space<vmem>>, vector<8x128xf32>
      %c0_24 = arith.constant 0 : index
      %c0_25 = arith.constant 0 : index
      %26 = vector.load %arg15[%c0_24, %c0_25] : memref<8x384xf32, #tpu.memory_space<vmem>>, vector<8x384xf32>
      %c0_26 = arith.constant 0 : index
      %c0_27 = arith.constant 0 : index
      %27 = vector.load %arg10[%c0_26, %c0_27] : memref<1x384xf32, #tpu.memory_space<vmem>>, vector<1x384xf32>
      %28 = vector.broadcast %27 : vector<1x384xf32> to vector<8x384xf32>
      %29 = arith.addf %26, %28 : vector<8x384xf32>
      %c0_28 = arith.constant 0 : index
      %c0_29 = arith.constant 0 : index
      %30 = vector.load %arg16[%c0_28, %c0_29] : memref<8x384xf32, #tpu.memory_space<vmem>>, vector<8x384xf32>
      %c0_30 = arith.constant 0 : index
      %c0_31 = arith.constant 0 : index
      %31 = vector.load %arg11[%c0_30, %c0_31] : memref<1x384xf32, #tpu.memory_space<vmem>>, vector<1x384xf32>
      %32 = vector.broadcast %31 : vector<1x384xf32> to vector<8x384xf32>
      %33 = arith.addf %30, %32 : vector<8x384xf32>
      %34 = vector.extract_strided_slice %29 {offsets = [0, 0], sizes = [8, 128], strides = [1, 1]} : vector<8x384xf32> to vector<8x128xf32>
      %35 = vector.extract_strided_slice %33 {offsets = [0, 0], sizes = [8, 128], strides = [1, 1]} : vector<8x384xf32> to vector<8x128xf32>
      %36 = arith.addf %34, %35 : vector<8x128xf32>
      %37 = arith.negf %36 : vector<8x128xf32>
      %38 = math.exp %37 : vector<8x128xf32>
      %cst_32 = arith.constant 1.000000e+00 : f32
      %39 = vector.broadcast %cst_32 : f32 to vector<8x128xf32>
      %40 = arith.addf %39, %38 : vector<8x128xf32>
      %41 = arith.divf %39, %40 : vector<8x128xf32>
      %42 = vector.extract_strided_slice %29 {offsets = [0, 128], sizes = [8, 128], strides = [1, 1]} : vector<8x384xf32> to vector<8x128xf32>
      %43 = vector.extract_strided_slice %33 {offsets = [0, 128], sizes = [8, 128], strides = [1, 1]} : vector<8x384xf32> to vector<8x128xf32>
      %44 = arith.addf %42, %43 : vector<8x128xf32>
      %45 = arith.negf %44 : vector<8x128xf32>
      %46 = math.exp %45 : vector<8x128xf32>
      %cst_33 = arith.constant 1.000000e+00 : f32
      %47 = vector.broadcast %cst_33 : f32 to vector<8x128xf32>
      %48 = arith.addf %47, %46 : vector<8x128xf32>
      %49 = arith.divf %47, %48 : vector<8x128xf32>
      %50 = vector.extract_strided_slice %29 {offsets = [0, 256], sizes = [8, 128], strides = [1, 1]} : vector<8x384xf32> to vector<8x128xf32>
      %51 = vector.extract_strided_slice %33 {offsets = [0, 256], sizes = [8, 128], strides = [1, 1]} : vector<8x384xf32> to vector<8x128xf32>
      %52 = arith.mulf %41, %51 : vector<8x128xf32>
      %53 = arith.addf %50, %52 : vector<8x128xf32>
      %54 = math.tanh %53 : vector<8x128xf32>
      %cst_34 = arith.constant 1.000000e+00 : f32
      %55 = vector.broadcast %cst_34 : f32 to vector<8x128xf32>
      %56 = arith.subf %55, %49 : vector<8x128xf32>
      %57 = arith.mulf %56, %54 : vector<8x128xf32>
      %58 = arith.mulf %49, %25 : vector<8x128xf32>
      %59 = arith.addf %57, %58 : vector<8x128xf32>
      %c0_35 = arith.constant 0 : index
      %c0_36 = arith.constant 0 : index
      %60 = vector.load %arg12[%c0_35, %c0_36] : memref<1x1xf32, #tpu.memory_space<vmem>>, vector<1x1xf32>
      %61 = vector.broadcast %60 : vector<1x1xf32> to vector<8x128xf32>
      %62 = arith.mulf %59, %61 : vector<8x128xf32>
      %63 = arith.addf %62, %25 : vector<8x128xf32>
      %cst_37 = arith.constant 0.000000e+00 : f32
      %64 = vector.broadcast %cst_37 : f32 to vector<8x128xf32>
      %65 = arith.maximumf %63, %64 : vector<8x128xf32>
      %c0_38 = arith.constant 0 : index
      %c0_39 = arith.constant 0 : index
      %66 = vector.load %arg13[%c0_38, %c0_39] : memref<8x128xf32, #tpu.memory_space<vmem>>, vector<8x128xf32>
      tpu.vector_store %arg13[%c0_38, %c0_39], %65 {strides = array<i32>} : memref<8x128xf32, #tpu.memory_space<vmem>>, vector<8x128xf32>,
    } else {
    }
    return
  }
  func.func @transform_0(%arg0: i32, %arg1: i32) -> (i32, i32) {
    %c0_i32 = arith.constant 0 : i32
    %c0_i32_0 = arith.constant 0 : i32
    %c0_i32_1 = arith.constant 0 : i32
    return %c0_i32, %c0_i32_0 : i32, i32
  }
  func.func @transform_1(%arg0: i32, %arg1: i32) -> (i32, i32) {
    %c0_i32 = arith.constant 0 : i32
    %c0_i32_0 = arith.constant 0 : i32
    %c0_i32_1 = arith.constant 0 : i32
    return %c0_i32, %c0_i32_0 : i32, i32
  }
  func.func @transform_2(%arg0: i32, %arg1: i32) -> (i32, i32) {
    %c0_i32 = arith.constant 0 : i32
    %c0_i32_0 = arith.constant 0 : i32
    %c0_i32_1 = arith.constant 0 : i32
    return %c0_i32, %c0_i32_0 : i32, i32
  }
  func.func @transform_3(%arg0: i32, %arg1: i32) -> (i32, i32) {
    %c0_i32 = arith.constant 0 : i32
    %c0_i32_0 = arith.constant 0 : i32
    %c0_i32_1 = arith.constant 0 : i32
    return %c0_i32, %c0_i32_0 : i32, i32
  }
  func.func @transform_4(%arg0: i32, %arg1: i32) -> (i32, i32) {
    %c0_i32 = arith.constant 0 : i32
    %c0_i32_0 = arith.constant 0 : i32
    %c0_i32_1 = arith.constant 0 : i32
    return %c0_i32, %c0_i32_0 : i32, i32
  }
  func.func @transform_5(%arg0: i32, %arg1: i32) -> (i32, i32) {
    %c0_i32 = arith.constant 0 : i32
    %c0_i32_0 = arith.constant 0 : i32
    %c0_i32_1 = arith.constant 0 : i32
    return %c0_i32, %c0_i32_0 : i32, i32
  }
  func.func @transform_6(%arg0: i32, %arg1: i32) -> (i32, i32) {
    %c0_i32 = arith.constant 0 : i32
    %c0_i32_0 = arith.constant 0 : i32
    return %arg1, %c0_i32 : i32, i32
  }
  func.func @transform_7(%arg0: i32, %arg1: i32) -> (i32, i32) {
    %c0_i32 = arith.constant 0 : i32
    %c0_i32_0 = arith.constant 0 : i32
    return %arg1, %c0_i32 : i32, i32
  }
  func.func @transform_8(%arg0: i32, %arg1: i32) -> (i32, i32) {
    %c0_i32 = arith.constant 0 : i32
    %c0_i32_0 = arith.constant 0 : i32
    %c0_i32_1 = arith.constant 0 : i32
    return %c0_i32, %c0_i32_0 : i32, i32
  }
  func.func @transform_9(%arg0: i32, %arg1: i32) -> (i32, i32) {
    %c0_i32 = arith.constant 0 : i32
    %c0_i32_0 = arith.constant 0 : i32
    %c0_i32_1 = arith.constant 0 : i32
    return %c0_i32, %c0_i32_0 : i32, i32
  }
  func.func @transform_10(%arg0: i32, %arg1: i32) -> (i32, i32) {
    %c0_i32 = arith.constant 0 : i32
    %c0_i32_0 = arith.constant 0 : i32
    %c0_i32_1 = arith.constant 0 : i32
    return %c0_i32, %c0_i32_0 : i32, i32
  }
  func.func @transform_11(%arg0: i32, %arg1: i32) -> (i32, i32) {
    %c0_i32 = arith.constant 0 : i32
    %c0_i32_0 = arith.constant 0 : i32
    %c0_i32_1 = arith.constant 0 : i32
    return %c0_i32, %c0_i32_0 : i32, i32
  }
}

</mosaic_0001>

<llo_original>
// kernel: tpu_custom_call.1
$region0: #{tpu_custom_call.1}
  #allocation0 [shape = 'u32[]', space=smem, size = 0x4, offset = 0x4, fixed_abs, tag = 'smem constant byte address 0x4 - core index']
  #allocation1 [shape = 'u32[144,128]{1,0:T(1,128)}', space=vmem, size = 0x12000, scoped, tag = 'internal scratch']
  #allocation2 [shape = 'f32[8,128]{1,0:T(8,128)}', space=vmem, size = 0x1000, scoped, tag = 'scratch operand']
  #allocation3 [shape = 'f32[8,384]{1,0:T(8,128)}', space=vmem, size = 0x3000, scoped, tag = 'scratch operand']
  #allocation4 [shape = 'f32[8,384]{1,0:T(8,128)}', space=vmem, size = 0x3000, scoped, tag = 'scratch operand']
  #allocation5 [shape = 'f32[1,1]{1,0:T(1,128)S(1)}', space=vmem, size = 0x200, scoped, tag = 'scoped memory for tpu_custom_call.1']
  %s0 = inlined_call_operand.hbm [shape: f32[8,9], index: 0, kind: input, shape index: {}]
  %s1 = inlined_call_operand.hbm [shape: f32[8,128], index: 1, kind: input, shape index: {}]
  %s2 = inlined_call_operand.vmem [shape: f32[1,128], index: 2, kind: input, shape index: {}]
  %s3 = inlined_call_operand.hbm [shape: f32[1,9], index: 3, kind: input, shape index: {}]
  %s4 = inlined_call_operand.vmem [shape: f32[1,128], index: 4, kind: input, shape index: {}]
  %s5 = inlined_call_operand.vmem [shape: f32[1,128], index: 5, kind: input, shape index: {}]
  %s6 = inlined_call_operand.hbm [shape: bf16[128,384], index: 6, kind: input, shape index: {}]
  %s7 = inlined_call_operand.hbm [shape: bf16[128,384], index: 7, kind: input, shape index: {}]
  %s8 = inlined_call_operand.vmem [shape: f32[1,384], index: 8, kind: input, shape index: {}]
  %s9 = inlined_call_operand.vmem [shape: f32[1,384], index: 9, kind: input, shape index: {}]
  %s10 = inlined_call_operand.<no memory space> [shape: f32[1,1], index: 10, kind: input, shape index: {}]
  %s11 = inlined_call_operand.hbm [shape: f32[8,128], index: 11, kind: output, shape index: {}]
  %s12 = sld [smem:[#allocation0]]
  $region109: #{tpu_custom_call.1} parent=0
    _
  %s14 = ssub.s32 1, %s12
  %s15 = scalar_select 0, %s14, %s12
  %v16 = vstv %s10
  %17 = vst [vmem:[#allocation5] sm:$0x1] %v16
  $region1: #{tpu_custom_call.1} parent=0
    #allocation6 [shape = 'u8[4096]{0}', space=vmem, size = 0x1000, scoped, tag = 'input window, operand 0, single buffered']
    #allocation7 [shape = 's32[2]{0}', space=sflag, size = 0x8, scoped, tag = 'scoped memory for tpu_custom_call.1']
    #allocation8 [shape = 's32[2]{0}', space=sflag, size = 0x8, scoped, tag = 'scoped memory for tpu_custom_call.1']
    #allocation9 [shape = 'u8[4096]{0}', space=vmem, size = 0x1000, scoped, tag = 'input window, operand 1, single buffered']
    #allocation10 [shape = 's32[1]{0}', space=sflag, size = 0x4, scoped, tag = 'scoped memory for tpu_custom_call.1']
    #allocation11 [shape = 'u8[512]{0}', space=vmem, size = 0x400, scoped, tag = 'input window, operand 3, single buffered']
    #allocation12 [shape = 'u8[98304]{0}', space=vmem, size = 0x18000, scoped, tag = 'input window, operand 6, single buffered']
    #allocation13 [shape = 's32[1]{0}', space=sflag, size = 0x4, scoped, tag = 'scoped memory for tpu_custom_call.1']
    #allocation14 [shape = 'u8[98304]{0}', space=vmem, size = 0x18000, scoped, tag = 'input window, operand 7, single buffered']
    #allocation15 [shape = 'u8[4096]{0}', space=vmem, size = 0x1000, scoped, tag = 'output window, operand 0, single buffered']
    %18 = vsyncpa [#allocation7], 0
    %19 = vsyncpa [#allocation10], 0
    %20 = vsyncpa [#allocation13], 0
    %21 = vsyncpa [#allocation8], 0
    loop: start=0, step=1, limit=4
    $region2: #{tpu_custom_call.1} parent=1 // loop_pre_header
      _
    $region3: #{tpu_custom_call.1} parent=1 // loop_header
      %s23 = sphi 0, %s27
      %p24 = scmp.ge.s32.totalorder %s23, 4
      %s30 = sphi 0, %s42
      %s31 = sphi 0, %s38
      %s32 = sphi 0, %s30
      %s33 = sphi 0, %s31
      %s34 = sphi 0, %s32
      %s35 = sphi 0, %s33
      %s43 = sphi 0, %s43
      %s45 = sphi 0, %s43
      %s46 = sphi 0, %s45
      %s60 = sphi 0, %s46
      %s64 = sphi 0, %s64
      %s66 = sphi 0, %s64
      %s67 = sphi 0, %s66
      %s81 = sphi 0, %s67
      %s85 = sphi 0, %s85
      %s87 = sphi 0, %s85
      %s88 = sphi 0, %s87
      %s102 = sphi 0, %s88
      %s106 = sphi 0, %s106
      %s108 = sphi 0, %s106
      %s109 = sphi 0, %s108
      %s123 = sphi 0, %s109
      %s127 = sphi 0, %s127
      %s129 = sphi 0, %s127
      %s130 = sphi 0, %s129
      %s144 = sphi 0, %s130
      %s148 = sphi 0, %s148
      %s150 = sphi 0, %s148
      %s151 = sphi 0, %s150
      %s165 = sphi 0, %s151
      %s171 = sphi 0, %s173
      %s174 = sphi 0, %s171
      %s175 = sphi 0, %s174
      %s191 = sphi 0, %s175
      %s197 = sphi 0, %s199
      %s200 = sphi 0, %s197
      %s201 = sphi 0, %s200
      %s217 = sphi 0, %s201
      %s221 = sphi 0, %s221
      %s223 = sphi 0, %s221
      %s224 = sphi 0, %s223
      %s238 = sphi 0, %s224
      %s242 = sphi 0, %s242
      %s244 = sphi 0, %s242
      %s245 = sphi 0, %s244
      %s259 = sphi 0, %s245
      %s263 = sphi 0, %s263
      %s265 = sphi 0, %s263
      %s266 = sphi 0, %s265
      %s280 = sphi 0, %s266
      %s284 = sphi 0, %s284
      %s286 = sphi 0, %s284
      %s287 = sphi 0, %s286
      %s301 = sphi 0, %s287
    $region4: #{tpu_custom_call.1} parent=1 // loop_header_branch
      %26 = sbr.rel (%p24) target = $region8
    $region5: #{tpu_custom_call.1} parent=1 // loop_body
      %s28 = ssub.s32 %s23, 1
      %s29 = ssub.s32 %s23, 2
      %s36 = sadd.s32 1, %s31
      %p37 = scmp.ge.s32.totalorder %s36, 1
      %s38 = scalar_select %p37, 0, %s36
      %s39 = sadd.s32 1, %s30
      %s40 = scalar_select %p37, %s39, %s30
      %p41 = scmp.ge.s32.totalorder %s40, 2
      %s42 = scalar_select %p41, 0, %s40
      %s44 = sadd.s32 %s43, 1
      %p47 = scmp.eq.s32.totalorder %s23, 1
      %p48 = scmp.ne.s32.totalorder %s43, %s45
      %p49 = scmp.eq.s32.totalorder %s23, 0
      %p50 = por %p48, %p49
      %p51 = scmp.ne.s32.totalorder %s43, %s45
      %p52 = scmp.eq.s32.totalorder %s28, 1
      %p53 = por %p51, %p52
      %p54 = scmp.ne.s32.totalorder %s45, %s46
      %p55 = scmp.eq.s32.totalorder %s28, 0
      %p56 = por %p54, %p55
      %p57 = scmp.ne.s32.totalorder %s45, %s46
      %p58 = scmp.eq.s32.totalorder %s29, 1
      %p59 = por %p57, %p58
      %p61 = scmp.ne.s32.totalorder %s46, %s60
      %p62 = scmp.eq.s32.totalorder %s29, 0
      %p63 = por %p61, %p62
      %s65 = sadd.s32 %s64, 1
      %p68 = scmp.eq.s32.totalorder %s23, 1
      %p69 = scmp.ne.s32.totalorder %s64, %s66
      %p70 = scmp.eq.s32.totalorder %s23, 0
      %p71 = por %p69, %p70
      %p72 = scmp.ne.s32.totalorder %s64, %s66
      %p73 = scmp.eq.s32.totalorder %s28, 1
      %p74 = por %p72, %p73
      %p75 = scmp.ne.s32.totalorder %s66, %s67
      %p76 = scmp.eq.s32.totalorder %s28, 0
      %p77 = por %p75, %p76
      %p78 = scmp.ne.s32.totalorder %s66, %s67
      %p79 = scmp.eq.s32.totalorder %s29, 1
      %p80 = por %p78, %p79
      %p82 = scmp.ne.s32.totalorder %s67, %s81
      %p83 = scmp.eq.s32.totalorder %s29, 0
      %p84 = por %p82, %p83
      %s86 = sadd.s32 %s85, 1
      %p89 = scmp.eq.s32.totalorder %s23, 1
      %p90 = scmp.ne.s32.totalorder %s85, %s87
      %p91 = scmp.eq.s32.totalorder %s23, 0
      %p92 = por %p90, %p91
      %p93 = scmp.ne.s32.totalorder %s85, %s87
      %p94 = scmp.eq.s32.totalorder %s28, 1
      %p95 = por %p93, %p94
      %p96 = scmp.ne.s32.totalorder %s87, %s88
      %p97 = scmp.eq.s32.totalorder %s28, 0
      %p98 = por %p96, %p97
      %p99 = scmp.ne.s32.totalorder %s87, %s88
      %p100 = scmp.eq.s32.totalorder %s29, 1
      %p101 = por %p99, %p100
      %p103 = scmp.ne.s32.totalorder %s88, %s102
      %p104 = scmp.eq.s32.totalorder %s29, 0
      %p105 = por %p103, %p104
      %s107 = sadd.s32 %s106, 1
      %p110 = scmp.eq.s32.totalorder %s23, 1
      %p111 = scmp.ne.s32.totalorder %s106, %s108
      %p112 = scmp.eq.s32.totalorder %s23, 0
      %p113 = por %p111, %p112
      %p114 = scmp.ne.s32.totalorder %s106, %s108
      %p115 = scmp.eq.s32.totalorder %s28, 1
      %p116 = por %p114, %p115
      %p117 = scmp.ne.s32.totalorder %s108, %s109
      %p118 = scmp.eq.s32.totalorder %s28, 0
      %p119 = por %p117, %p118
      %p120 = scmp.ne.s32.totalorder %s108, %s109
      %p121 = scmp.eq.s32.totalorder %s29, 1
      %p122 = por %p120, %p121
      %p124 = scmp.ne.s32.totalorder %s109, %s123
      %p125 = scmp.eq.s32.totalorder %s29, 0
      %p126 = por %p124, %p125
      %s128 = sadd.s32 %s127, 1
      %p131 = scmp.eq.s32.totalorder %s23, 1
      %p132 = scmp.ne.s32.totalorder %s127, %s129
      %p133 = scmp.eq.s32.totalorder %s23, 0
      %p134 = por %p132, %p133
      %p135 = scmp.ne.s32.totalorder %s127, %s129
      %p136 = scmp.eq.s32.totalorder %s28, 1
      %p137 = por %p135, %p136
      %p138 = scmp.ne.s32.totalorder %s129, %s130
      %p139 = scmp.eq.s32.totalorder %s28, 0
      %p140 = por %p138, %p139
      %p141 = scmp.ne.s32.totalorder %s129, %s130
      %p142 = scmp.eq.s32.totalorder %s29, 1
      %p143 = por %p141, %p142
      %p145 = scmp.ne.s32.totalorder %s130, %s144
      %p146 = scmp.eq.s32.totalorder %s29, 0
      %p147 = por %p145, %p146
      %s149 = sadd.s32 %s148, 1
      %p152 = scmp.eq.s32.totalorder %s23, 1
      %p153 = scmp.ne.s32.totalorder %s148, %s150
      %p154 = scmp.eq.s32.totalorder %s23, 0
      %p155 = por %p153, %p154
      %p156 = scmp.ne.s32.totalorder %s148, %s150
      %p157 = scmp.eq.s32.totalorder %s28, 1
      %p158 = por %p156, %p157
      %p159 = scmp.ne.s32.totalorder %s150, %s151
      %p160 = scmp.eq.s32.totalorder %s28, 0
      %p161 = por %p159, %p160
      %p162 = scmp.ne.s32.totalorder %s150, %s151
      %p163 = scmp.eq.s32.totalorder %s29, 1
      %p164 = por %p162, %p163
      %p166 = scmp.ne.s32.totalorder %s151, %s165
      %p167 = scmp.eq.s32.totalorder %s29, 0
      %p168 = por %p166, %p167
      %s169 = ssub.s32 %s31, %s38
      %p170 = scmp.eq.s32.totalorder %s169, 0
      %s172 = sadd.s32 %s171, 1
      %s173 = scalar_select %p170, %s171, %s172
      %p176 = pneg %p170
      %p177 = scmp.eq.s32.totalorder %s23, 1
      %p178 = por %p176, %p177
      %p179 = scmp.ne.s32.totalorder %s171, %s174
      %p180 = scmp.eq.s32.totalorder %s23, 0
      %p181 = por %p179, %p180
      %p182 = scmp.ne.s32.totalorder %s171, %s174
      %p183 = scmp.eq.s32.totalorder %s28, 1
      %p184 = por %p182, %p183
      %p185 = scmp.ne.s32.totalorder %s174, %s175
      %p186 = scmp.eq.s32.totalorder %s28, 0
      %p187 = por %p185, %p186
      %p188 = scmp.ne.s32.totalorder %s174, %s175
      %p189 = scmp.eq.s32.totalorder %s29, 1
      %p190 = por %p188, %p189
      %p192 = scmp.ne.s32.totalorder %s175, %s191
      %p193 = scmp.eq.s32.totalorder %s29, 0
      %p194 = por %p192, %p193
      %s195 = ssub.s32 %s31, %s38
      %p196 = scmp.eq.s32.totalorder %s195, 0
      %s198 = sadd.s32 %s197, 1
      %s199 = scalar_select %p196, %s197, %s198
      %p202 = pneg %p196
      %p203 = scmp.eq.s32.totalorder %s23, 1
      %p204 = por %p202, %p203
      %p205 = scmp.ne.s32.totalorder %s197, %s200
      %p206 = scmp.eq.s32.totalorder %s23, 0
      %p207 = por %p205, %p206
      %p208 = scmp.ne.s32.totalorder %s197, %s200
      %p209 = scmp.eq.s32.totalorder %s28, 1
      %p210 = por %p208, %p209
      %p211 = scmp.ne.s32.totalorder %s200, %s201
      %p212 = scmp.eq.s32.totalorder %s28, 0
      %p213 = por %p211, %p212
      %p214 = scmp.ne.s32.totalorder %s200, %s201
      %p215 = scmp.eq.s32.totalorder %s29, 1
      %p216 = por %p214, %p215
      %p218 = scmp.ne.s32.totalorder %s201, %s217
      %p219 = scmp.eq.s32.totalorder %s29, 0
      %p220 = por %p218, %p219
      %s222 = sadd.s32 %s221, 1
      %p225 = scmp.eq.s32.totalorder %s23, 1
      %p226 = scmp.ne.s32.totalorder %s221, %s223
      %p227 = scmp.eq.s32.totalorder %s23, 0
      %p228 = por %p226, %p227
      %p229 = scmp.ne.s32.totalorder %s221, %s223
      %p230 = scmp.eq.s32.totalorder %s28, 1
      %p231 = por %p229, %p230
      %p232 = scmp.ne.s32.totalorder %s223, %s224
      %p233 = scmp.eq.s32.totalorder %s28, 0
      %p234 = por %p232, %p233
      %p235 = scmp.ne.s32.totalorder %s223, %s224
      %p236 = scmp.eq.s32.totalorder %s29, 1
      %p237 = por %p235, %p236
      %p239 = scmp.ne.s32.totalorder %s224, %s238
      %p240 = scmp.eq.s32.totalorder %s29, 0
      %p241 = por %p239, %p240
      %s243 = sadd.s32 %s242, 1
      %p246 = scmp.eq.s32.totalorder %s23, 1
      %p247 = scmp.ne.s32.totalorder %s242, %s244
      %p248 = scmp.eq.s32.totalorder %s23, 0
      %p249 = por %p247, %p248
      %p250 = scmp.ne.s32.totalorder %s242, %s244
      %p251 = scmp.eq.s32.totalorder %s28, 1
      %p252 = por %p250, %p251
      %p253 = scmp.ne.s32.totalorder %s244, %s245
      %p254 = scmp.eq.s32.totalorder %s28, 0
      %p255 = por %p253, %p254
      %p256 = scmp.ne.s32.totalorder %s244, %s245
      %p257 = scmp.eq.s32.totalorder %s29, 1
      %p258 = por %p256, %p257
      %p260 = scmp.ne.s32.totalorder %s245, %s259
      %p261 = scmp.eq.s32.totalorder %s29, 0
      %p262 = por %p260, %p261
      %s264 = sadd.s32 %s263, 1
      %p267 = scmp.eq.s32.totalorder %s23, 1
      %p268 = scmp.ne.s32.totalorder %s263, %s265
      %p269 = scmp.eq.s32.totalorder %s23, 0
      %p270 = por %p268, %p269
      %p271 = scmp.ne.s32.totalorder %s263, %s265
      %p272 = scmp.eq.s32.totalorder %s28, 1
      %p273 = por %p271, %p272
      %p274 = scmp.ne.s32.totalorder %s265, %s266
      %p275 = scmp.eq.s32.totalorder %s28, 0
      %p276 = por %p274, %p275
      %p277 = scmp.ne.s32.totalorder %s265, %s266
      %p278 = scmp.eq.s32.totalorder %s29, 1
      %p279 = por %p277, %p278
      %p281 = scmp.ne.s32.totalorder %s266, %s280
      %p282 = scmp.eq.s32.totalorder %s29, 0
      %p283 = por %p281, %p282
      %s285 = sadd.s32 %s284, 1
      %p288 = scmp.eq.s32.totalorder %s23, 1
      %p289 = scmp.ne.s32.totalorder %s284, %s286
      %p290 = scmp.eq.s32.totalorder %s23, 0
      %p291 = por %p289, %p290
      %p292 = scmp.ne.s32.totalorder %s284, %s286
      %p293 = scmp.eq.s32.totalorder %s28, 1
      %p294 = por %p292, %p293
      %p295 = scmp.ne.s32.totalorder %s286, %s287
      %p296 = scmp.eq.s32.totalorder %s28, 0
      %p297 = por %p295, %p296
      %p298 = scmp.ne.s32.totalorder %s286, %s287
      %p299 = scmp.eq.s32.totalorder %s29, 1
      %p300 = por %p298, %p299
      %p302 = scmp.ne.s32.totalorder %s287, %s301
      %p303 = scmp.eq.s32.totalorder %s29, 0
      %p304 = por %p302, %p303
      %p305 = scmp.le.s32.totalorder 1, %s23
      %p306 = scmp.lt.s32.totalorder %s23, 3
      %p307 = pnand %p305, %p306
      %p308 = pneg %p307
      // Predicated region
      $region9: #{tpu_custom_call.1} parent=5 // pred_check
        _
      $region10: #{tpu_custom_call.1} parent=5 // pred_check_branch
        %310 = sbr.rel (%p307) target = $region12
      $region11: #{tpu_custom_call.1} parent=5 // pred_region
        %s311 = ssub.s32 %s23, 1
        // Predicated region
        $region13: #{tpu_custom_call.1} parent=11 // pred_check
          %p312 = pneg %p56
        $region14: #{tpu_custom_call.1} parent=11 // pred_check_branch
          %314 = sbr.rel (%p312) target = $region16
        $region15: #{tpu_custom_call.1} parent=11 // pred_region
          %s316 = ssub.s32 128, 128
          %317 = vsyncadd [#allocation7], %s316
          %s319 = sshll.u32 [#allocation6], 4
          %s320 = int_to_ptr.vmem [resolvable:$true] %s319
          %322 = dma.hbm_to_vmem [thread:$0]  %s0, 128, %s320, [#allocation7]
        $region16: #{tpu_custom_call.1} parent=11 // pred_fallthru
          _
        // Predicated region
        $region17: #{tpu_custom_call.1} parent=11 // pred_check
          %p323 = pneg %p77
        $region18: #{tpu_custom_call.1} parent=11 // pred_check_branch
          %325 = sbr.rel (%p323) target = $region20
        $region19: #{tpu_custom_call.1} parent=11 // pred_region
          %s327 = ssub.s32 128, 128
          %328 = vsyncadd [#allocation10], %s327
          %s330 = sshll.u32 [#allocation9], 4
          %s331 = int_to_ptr.vmem [resolvable:$true] %s330
          %333 = dma.hbm_to_vmem [thread:$0]  %s1, 128, %s331, [#allocation10]
        $region20: #{tpu_custom_call.1} parent=11 // pred_fallthru
          _
        // Predicated region
        $region21: #{tpu_custom_call.1} parent=11 // pred_check
          %p334 = pneg %p98
        $region22: #{tpu_custom_call.1} parent=11 // pred_check_branch
          %336 = sbr.rel (%p334) target = $region24
        $region23: #{tpu_custom_call.1} parent=11 // pred_region
          _
        $region24: #{tpu_custom_call.1} parent=11 // pred_fallthru
          _
        // Predicated region
        $region25: #{tpu_custom_call.1} parent=11 // pred_check
          %p337 = pneg %p119
        $region26: #{tpu_custom_call.1} parent=11 // pred_check_branch
          %339 = sbr.rel (%p337) target = $region28
        $region27: #{tpu_custom_call.1} parent=11 // pred_region
          %s341 = ssub.s32 16, 16
          %342 = vsyncadd [#allocation10], %s341
          %s344 = sshll.u32 [#allocation11], 4
          %s345 = int_to_ptr.vmem [resolvable:$true] %s344
          %347 = dma.hbm_to_vmem [thread:$0]  %s3, 16, %s345, [#allocation10]
        $region28: #{tpu_custom_call.1} parent=11 // pred_fallthru
          _
        // Predicated region
        $region29: #{tpu_custom_call.1} parent=11 // pred_check
          %p348 = pneg %p140
        $region30: #{tpu_custom_call.1} parent=11 // pred_check_branch
          %350 = sbr.rel (%p348) target = $region32
        $region31: #{tpu_custom_call.1} parent=11 // pred_region
          _
        $region32: #{tpu_custom_call.1} parent=11 // pred_fallthru
          _
        // Predicated region
        $region33: #{tpu_custom_call.1} parent=11 // pred_check
          %p351 = pneg %p161
        $region34: #{tpu_custom_call.1} parent=11 // pred_check_branch
          %353 = sbr.rel (%p351) target = $region36
        $region35: #{tpu_custom_call.1} parent=11 // pred_region
          _
        $region36: #{tpu_custom_call.1} parent=11 // pred_fallthru
          _
        // Predicated region
        $region37: #{tpu_custom_call.1} parent=11 // pred_check
          %p354 = pneg %p187
        $region38: #{tpu_custom_call.1} parent=11 // pred_check_branch
          %356 = sbr.rel (%p354) target = $region40
        $region39: #{tpu_custom_call.1} parent=11 // pred_region
          %s357 = smul.u32 16, %s33
          %s359 = ssub.s32 3072, 3072
          %360 = vsyncadd [#allocation13], %s359
          %s361 = smul.addr %s357, 3
          %s362 = smul.addr %s361, 64
          %s363 = scalar_lea.hbm %s6, %s362
          %s364 = sshll.u32 [#allocation12], 4
          %s365 = int_to_ptr.vmem [resolvable:$true] %s364
          %370 = dma.hbm_to_vmem [thread:$0]  %s363, 3072, %s365, [#allocation13], 192, 192, 12
        $region40: #{tpu_custom_call.1} parent=11 // pred_fallthru
          _
        // Predicated region
        $region41: #{tpu_custom_call.1} parent=11 // pred_check
          %p371 = pneg %p213
        $region42: #{tpu_custom_call.1} parent=11 // pred_check_branch
          %373 = sbr.rel (%p371) target = $region44
        $region43: #{tpu_custom_call.1} parent=11 // pred_region
          %s374 = smul.u32 16, %s33
          %s376 = ssub.s32 3072, 3072
          %377 = vsyncadd [#allocation13], %s376
          %s378 = smul.addr %s374, 3
          %s379 = smul.addr %s378, 64
          %s380 = scalar_lea.hbm %s7, %s379
          %s381 = sshll.u32 [#allocation14], 4
          %s382 = int_to_ptr.vmem [resolvable:$true] %s381
          %387 = dma.hbm_to_vmem [thread:$0]  %s380, 3072, %s382, [#allocation13], 192, 192, 12
        $region44: #{tpu_custom_call.1} parent=11 // pred_fallthru
          _
        // Predicated region
        $region45: #{tpu_custom_call.1} parent=11 // pred_check
          %p388 = pneg %p234
        $region46: #{tpu_custom_call.1} parent=11 // pred_check_branch
          %390 = sbr.rel (%p388) target = $region48
        $region47: #{tpu_custom_call.1} parent=11 // pred_region
          _
        $region48: #{tpu_custom_call.1} parent=11 // pred_fallthru
          _
        // Predicated region
        $region49: #{tpu_custom_call.1} parent=11 // pred_check
          %p391 = pneg %p255
        $region50: #{tpu_custom_call.1} parent=11 // pred_check_branch
          %393 = sbr.rel (%p391) target = $region52
        $region51: #{tpu_custom_call.1} parent=11 // pred_region
          _
        $region52: #{tpu_custom_call.1} parent=11 // pred_fallthru
          _
        // Predicated region
        $region53: #{tpu_custom_call.1} parent=11 // pred_check
          %p394 = pneg %p276
        $region54: #{tpu_custom_call.1} parent=11 // pred_check_branch
          %396 = sbr.rel (%p394) target = $region56
        $region55: #{tpu_custom_call.1} parent=11 // pred_region
          _
        $region56: #{tpu_custom_call.1} parent=11 // pred_fallthru
          _
      $region12: #{tpu_custom_call.1} parent=5 // pred_fallthru
        _
      %p397 = scmp.lt.s32.totalorder %s23, 2
      // Predicated region
      $region57: #{tpu_custom_call.1} parent=5 // pred_check
        %p398 = pneg %p397
      $region58: #{tpu_custom_call.1} parent=5 // pred_check_branch
        %400 = sbr.rel (%p398) target = $region60
      $region59: #{tpu_custom_call.1} parent=5 // pred_region
        _
      $region60: #{tpu_custom_call.1} parent=5 // pred_fallthru
        _
      %p401 = scmp.le.s32.totalorder 1, %s23
      %p402 = scmp.lt.s32.totalorder %s23, 3
      %p403 = pnand %p401, %p402
      %p404 = pneg %p403
      // Predicated region
      $region61: #{tpu_custom_call.1} parent=5 // pred_check
        _
      $region62: #{tpu_custom_call.1} parent=5 // pred_check_branch
        %406 = sbr.rel (%p403) target = $region64
      $region63: #{tpu_custom_call.1} parent=5 // pred_region
        %s407 = ssub.s32 %s23, 1
        // Predicated region
        $region65: #{tpu_custom_call.1} parent=63 // pred_check
          %p408 = pneg %p56
        $region66: #{tpu_custom_call.1} parent=63 // pred_check_branch
          %410 = sbr.rel (%p408) target = $region68
        $region67: #{tpu_custom_call.1} parent=63 // pred_region
          %411 = dma.done [#allocation7], 128
        $region68: #{tpu_custom_call.1} parent=63 // pred_fallthru
          _
        // Predicated region
        $region69: #{tpu_custom_call.1} parent=63 // pred_check
          %p412 = pneg %p77
        $region70: #{tpu_custom_call.1} parent=63 // pred_check_branch
          %414 = sbr.rel (%p412) target = $region72
        $region71: #{tpu_custom_call.1} parent=63 // pred_region
          %415 = dma.done [#allocation10], 128
        $region72: #{tpu_custom_call.1} parent=63 // pred_fallthru
          _
        // Predicated region
        $region73: #{tpu_custom_call.1} parent=63 // pred_check
          %p416 = pneg %p119
        $region74: #{tpu_custom_call.1} parent=63 // pred_check_branch
          %418 = sbr.rel (%p416) target = $region76
        $region75: #{tpu_custom_call.1} parent=63 // pred_region
          %419 = dma.done [#allocation10], 16
        $region76: #{tpu_custom_call.1} parent=63 // pred_fallthru
          _
        // Predicated region
        $region77: #{tpu_custom_call.1} parent=63 // pred_check
          %p420 = pneg %p187
        $region78: #{tpu_custom_call.1} parent=63 // pred_check_branch
          %422 = sbr.rel (%p420) target = $region80
        $region79: #{tpu_custom_call.1} parent=63 // pred_region
          %423 = dma.done [#allocation13], 3072
        $region80: #{tpu_custom_call.1} parent=63 // pred_fallthru
          _
        // Predicated region
        $region81: #{tpu_custom_call.1} parent=63 // pred_check
          %p424 = pneg %p213
        $region82: #{tpu_custom_call.1} parent=63 // pred_check_branch
          %426 = sbr.rel (%p424) target = $region84
        $region83: #{tpu_custom_call.1} parent=63 // pred_region
          %427 = dma.done [#allocation13], 3072
        $region84: #{tpu_custom_call.1} parent=63 // pred_fallthru
          _
        %p428 = pneg %p56
        %p429 = pneg %p53
        %p430 = pneg %p77
        %p431 = pneg %p74
        %p432 = pneg %p98
        %p433 = pneg %p95
        %p434 = pneg %p119
        %p435 = pneg %p116
        %p436 = pneg %p140
        %p437 = pneg %p137
        %p438 = pneg %p161
        %p439 = pneg %p158
        %p440 = pneg %p187
        %p441 = pneg %p184
        %p442 = pneg %p213
        %p443 = pneg %p210
        %p444 = pneg %p234
        %p445 = pneg %p231
        %p446 = pneg %p255
        %p447 = pneg %p252
        %p448 = pneg %p276
        %p449 = pneg %p273
        %p450 = pneg %p297
        %p451 = pneg %p294
        %s452 = smul.u32 16, %s33
        %s453 = smul.u32 16, %s33
        %p455 = scmp.eq.s32.totalorder %s32, 0
        %p456 = scmp.eq.s32.totalorder %s33, 0
        %p457 = pnand %p455, %p456
        %p458 = pneg %p457
        // Predicated region
        $region85: #{tpu_custom_call.1} parent=63 // pred_check
          _
        $region86: #{tpu_custom_call.1} parent=63 // pred_check_branch
          %460 = sbr.rel (%p457) target = $region88
        $region87: #{tpu_custom_call.1} parent=63 // pred_region
          %v461 = vld [vmem:[#allocation9] sm:$0xff]
          %462 = vst [vmem:[#allocation15] sm:$0xff] %v461
          %v463 = vld [vmem:[%s2] sm:$0x1]
          %v465 = vlaneseq
          %v466 = vshrl.u32 %v465, 7
          %v467 = vsub.s32 0, %v466
          %v468 = vrot.slane %v463, %v467
          %470 = vst [vmem:[#allocation2] sm:$0xff] %v468
        $region88: #{tpu_custom_call.1} parent=63 // pred_fallthru
          _
        // Predicated region
        $region89: #{tpu_custom_call.1} parent=63 // pred_check
          %p471 = pneg %p456
        $region90: #{tpu_custom_call.1} parent=63 // pred_check_branch
          %473 = sbr.rel (%p471) target = $region92
        $region91: #{tpu_custom_call.1} parent=63 // pred_region
          %v474 = vld [vmem:[#allocation15] sm:$0xff]
          %v475 = vld [vmem:[#allocation6] sm:$0x1]
          %v476 = vld [vmem:[#allocation11] sm:$0x1]
          %v477 = vmul.f32 %v475, %v476
          %vm478 = vcmask 65536
          %v479 = vsel %vm478, %v477, 0.0
          %480 = vadd.xlane.f32.xlu0 %v479
          %v481 = vpop.xlane.xlu0 %480
          %v482 = vmax.f32 %v481, 0.0
          %v483 = vld [vmem:[%s4] sm:$0x1]
          %v484 = vmul.f32 %v474, %v483
          %vm485 = vcmask 1040384
          %v486 = vsel %vm485, %v484, 0.0
          %487 = vadd.xlane.f32.xlu0 %v486
          %v488 = vpop.xlane.xlu0 %487
          %v489 = vld [vmem:[#allocation2] sm:$0xff]
          %v490 = vld [vmem:[%s5] sm:$0x1]
          %v492 = vlaneseq
          %v493 = vshrl.u32 %v492, 7
          %v494 = vsub.s32 0, %v493
          %v495 = vrot.slane %v490, %v494
          %v497 = vmul.f32 %v489, %v495
          %498 = vadd.xlane.f32.xlu0 %v497
          %v499 = vpop.xlane.xlu0 %498
          %v500 = vlaneseq
          %v501 = vshrl.u32 %v500, 7
          %v502 = vsub.s32 0, %v501
          %v503 = vrot.slane %v488, %v502
          %v504 = vadd.f32 %v503, %v499
          %v505 = vtanh.pop %v504
          %v506 = vlaneseq
          %v507 = vshrl.u32 %v506, 7
          %v508 = vsub.s32 0, %v507
          %v509 = vrot.slane %v482, %v508
          %v510 = vmul.f32 %v509, %v505
          %v511 = vrot.slane %v510, 4
          %v512 = vmax.f32 %v510, %v511
          %v513 = vrot.slane %v512, 2
          %v514 = vmax.f32 %v512, %v513
          %v515 = vrot.slane %v514, 1
          %v516 = vmax.f32 %v514, %v515
          %v517 = vsub.f32 %v510, %v516
          %v518 = vmul.f32 %v517, 1.442695
          %v519 = vpow.pop %v518
          %v520 = vrot.slane %v519, 4
          %v521 = vadd.f32 %v519, %v520
          %v522 = vrot.slane %v521, 2
          %v523 = vadd.f32 %v521, %v522
          %v524 = vrot.slane %v523, 1
          %v525 = vadd.f32 %v523, %v524
          %v526 = vrcp.pop %v525
          %v527 = vmul.f32 %v519, %v526
          %v528 = vmul.f32 %v527, %v474
          %529 = vst [vmem:[#allocation2] sm:$0xff] %v528
          %530 = vst [vmem:[#allocation3] sm:$0xff] 0.0
          %531 = vst [vmem:[#allocation3 + $0x8] sm:$0xff] 0.0
          %532 = vst [vmem:[#allocation3 + $0x10] sm:$0xff] 0.0
          %533 = vst [vmem:[#allocation4] sm:$0xff] 0.0
          %534 = vst [vmem:[#allocation4 + $0x8] sm:$0xff] 0.0
          %535 = vst [vmem:[#allocation4 + $0x10] sm:$0xff] 0.0
        $region92: #{tpu_custom_call.1} parent=63 // pred_fallthru
          _
        %v536 = vld [vmem:[#allocation2] sm:$0xff]
        %v537 = vld [vmem:[#allocation15] sm:$0xff]
        %v538 = vld [vmem:[#allocation3] sm:$0xff]
        %v539 = vld [vmem:[#allocation3 + $0x8] sm:$0xff]
        %v540 = vld [vmem:[#allocation3 + $0x10] sm:$0xff]
        %v541 = vpack.c.bf16 %v536, %v536
        %v542 = vld [vmem:[#allocation12] sm:$0xff]
        %v543 = vld [vmem:[#allocation12 + $0x8] sm:$0xf]
        %v544 = vld [vmem:[#allocation12 + $0xc] sm:$0xff]
        %v545 = vld [vmem:[#allocation12 + $0x14] sm:$0xf]
        %v546 = vld [vmem:[#allocation12 + $0x18] sm:$0xff]
        %v547 = vld [vmem:[#allocation12 + $0x20] sm:$0xf]
        %v548 = vld [vmem:[#allocation12 + $0x24] sm:$0xff]
        %v549 = vld [vmem:[#allocation12 + $0x2c] sm:$0xf]
        %v550 = vld [vmem:[#allocation12 + $0x30] sm:$0xff]
        %v551 = vld [vmem:[#allocation12 + $0x38] sm:$0xf]
        %v552 = vld [vmem:[#allocation12 + $0x3c] sm:$0xff]
        %v553 = vld [vmem:[#allocation12 + $0x44] sm:$0xf]
        %v554 = vld [vmem:[#allocation12 + $0x48] sm:$0xff]
        %v555 = vld [vmem:[#allocation12 + $0x50] sm:$0xf]
        %v556 = vld [vmem:[#allocation12 + $0x54] sm:$0xff]
        %v557 = vld [vmem:[#allocation12 + $0x5c] sm:$0xf]
        %v558 = vld [vmem:[#allocation12 + $0x60] sm:$0xff]
        %v559 = vld [vmem:[#allocation12 + $0x68] sm:$0xf]
        %v560 = vld [vmem:[#allocation12 + $0x6c] sm:$0xff]
        %v561 = vld [vmem:[#allocation12 + $0x74] sm:$0xf]
        %v562 = vld [vmem:[#allocation12 + $0x78] sm:$0xff]
        %v563 = vld [vmem:[#allocation12 + $0x80] sm:$0xf]
        %v564 = vld [vmem:[#allocation12 + $0x84] sm:$0xff]
        %v565 = vld [vmem:[#allocation12 + $0x8c] sm:$0xf]
        %v566 = vld [vmem:[#allocation12 + $0x90] sm:$0xff]
        %v567 = vld [vmem:[#allocation12 + $0x98] sm:$0xf]
        %v568 = vld [vmem:[#allocation12 + $0x9c] sm:$0xff]
        %v569 = vld [vmem:[#allocation12 + $0xa4] sm:$0xf]
        %v570 = vld [vmem:[#allocation12 + $0xa8] sm:$0xff]
        %v571 = vld [vmem:[#allocation12 + $0xb0] sm:$0xf]
        %v572 = vld [vmem:[#allocation12 + $0xb4] sm:$0xff]
        %v573 = vld [vmem:[#allocation12 + $0xbc] sm:$0xf]
        %v606 = vunpack.c.l.b16 %v542
        %v607 = vunpack.c.h.b16 %v542
        %v608 = vunpack.c.l.b16 %v543
        %v609 = vunpack.c.l.b16 %v544
        %v610 = vunpack.c.h.b16 %v544
        %v611 = vunpack.c.l.b16 %v545
        %v612 = vunpack.c.l.b16 %v546
        %v613 = vunpack.c.h.b16 %v546
        %v614 = vunpack.c.l.b16 %v547
        %v615 = vunpack.c.l.b16 %v548
        %v616 = vunpack.c.h.b16 %v548
        %v617 = vunpack.c.l.b16 %v549
        %v618 = vunpack.c.l.b16 %v550
        %v619 = vunpack.c.h.b16 %v550
        %v620 = vunpack.c.l.b16 %v551
        %v621 = vunpack.c.l.b16 %v552
        %v622 = vunpack.c.h.b16 %v552
        %v623 = vunpack.c.l.b16 %v553
        %v624 = vunpack.c.l.b16 %v554
        %v625 = vunpack.c.h.b16 %v554
        %v626 = vunpack.c.l.b16 %v555
        %v627 = vunpack.c.l.b16 %v556
        %v628 = vunpack.c.h.b16 %v556
        %v629 = vunpack.c.l.b16 %v557
        %v630 = vunpack.c.l.b16 %v558
        %v631 = vunpack.c.h.b16 %v558
        %v632 = vunpack.c.l.b16 %v559
        %v633 = vunpack.c.l.b16 %v560
        %v634 = vunpack.c.h.b16 %v560
        %v635 = vunpack.c.l.b16 %v561
        %v636 = vunpack.c.l.b16 %v562
        %v637 = vunpack.c.h.b16 %v562
        %v638 = vunpack.c.l.b16 %v563
        %v639 = vunpack.c.l.b16 %v564
        %v640 = vunpack.c.h.b16 %v564
        %v641 = vunpack.c.l.b16 %v565
        %v642 = vunpack.c.l.b16 %v566
        %v643 = vunpack.c.h.b16 %v566
        %v644 = vunpack.c.l.b16 %v567
        %v645 = vunpack.c.l.b16 %v568
        %v646 = vunpack.c.h.b16 %v568
        %v647 = vunpack.c.l.b16 %v569
        %v648 = vunpack.c.l.b16 %v570
        %v649 = vunpack.c.h.b16 %v570
        %v650 = vunpack.c.l.b16 %v571
        %v651 = vunpack.c.l.b16 %v572
        %v652 = vunpack.c.h.b16 %v572
        %v653 = vunpack.c.l.b16 %v573
        %v654 = vpack.c.b16 %v609, %v606
        %v655 = vpack.c.b16 %v610, %v607
        %v656 = vpack.c.b16 %v611, %v608
        %v657 = vpack.c.b16 %v615, %v612
        %v658 = vpack.c.b16 %v616, %v613
        %v659 = vpack.c.b16 %v617, %v614
        %v660 = vpack.c.b16 %v621, %v618
        %v661 = vpack.c.b16 %v622, %v619
        %v662 = vpack.c.b16 %v623, %v620
        %v663 = vpack.c.b16 %v627, %v624
        %v664 = vpack.c.b16 %v628, %v625
        %v665 = vpack.c.b16 %v629, %v626
        %v666 = vpack.c.b16 %v633, %v630
        %v667 = vpack.c.b16 %v634, %v631
        %v668 = vpack.c.b16 %v635, %v632
        %v669 = vpack.c.b16 %v639, %v636
        %v670 = vpack.c.b16 %v640, %v637
        %v671 = vpack.c.b16 %v641, %v638
        %v672 = vpack.c.b16 %v645, %v642
        %v673 = vpack.c.b16 %v646, %v643
        %v674 = vpack.c.b16 %v647, %v644
        %v675 = vpack.c.b16 %v651, %v648
        %v676 = vpack.c.b16 %v652, %v649
        %v677 = vpack.c.b16 %v653, %v650
        %702 = vmatprep.subr.bf16.mxu0 %v676
        %703 = vmatpush1.bf16.msra.mxu0 %v675
        %704 = vmatprep.subr.bf16.mxu0 %v673
        %705 = vmatpush1.bf16.msra.mxu0 %v672
        %706 = vmatprep.subr.bf16.mxu0 %v670
        %707 = vmatpush1.bf16.msra.mxu0 %v669
        %708 = vmatprep.subr.bf16.mxu0 %v667
        %709 = vmatpush1.bf16.msra.mxu0 %v666
        %710 = vmatprep.subr.bf16.mxu0 %v664
        %711 = vmatpush1.bf16.msra.mxu0 %v663
        %712 = vmatprep.subr.bf16.mxu0 %v661
        %713 = vmatpush1.bf16.msra.mxu0 %v660
        %714 = vmatprep.subr.bf16.mxu0 %v658
        %715 = vmatpush1.bf16.msra.mxu0 %v657
        %716 = vmatprep.subr.bf16.mxu0 %v655
        %717 = vmatpush1.bf16.msra.mxu0 %v654
        %718 = vmatprep.subr.bf16.mxu0 0
        %719 = vmatpush2.bf16.msra.mxu0 0
        %720 = vmatprep.subr.bf16.mxu0 0
        %721 = vmatpush2.bf16.msra.mxu0 0
        %722 = vmatprep.subr.bf16.mxu0 0
        %723 = vmatpush2.bf16.msra.mxu0 0
        %724 = vmatprep.subr.bf16.mxu0 0
        %725 = vmatpush2.bf16.msra.mxu0 0
        %726 = vmatprep.subr.bf16.mxu0 0
        %727 = vmatpush2.bf16.msra.mxu0 0
        %728 = vmatprep.subr.bf16.mxu0 0
        %729 = vmatpush2.bf16.msra.mxu0 0
        %730 = vmatprep.subr.bf16.mxu0 0
        %731 = vmatpush2.bf16.msra.mxu0 0
        %732 = vmatprep.subr.bf16.mxu0 0
        %733 = vmatpush2.bf16.msra.mxu0 0
        %734 = vmatprep.mubr.bf16.mxu0 0
        %735 = vmatmul.mubr.bf16.gmra.mxu0 %v541
        %v736 = vpop.f32.mrf.mxu0
        %v737 = vadd.f32 0.0, %v736
        %v738 = vpop.f32.mrf.mxu0
        %v739 = vadd.f32 0.0, %v738
        %v740 = vpop.f32.mrf.mxu0
        %v741 = vpop.f32.mrf.mxu0
        %742 = vdwg.mxu0
        %743 = vmatprep.subr.bf16.mxu0 0
        %744 = vmatpush1.bf16.msra.mxu0 %v677
        %745 = vmatprep.subr.bf16.mxu0 0
        %746 = vmatpush1.bf16.msra.mxu0 %v674
        %747 = vmatprep.subr.bf16.mxu0 0
        %748 = vmatpush1.bf16.msra.mxu0 %v671
        %749 = vmatprep.subr.bf16.mxu0 0
        %750 = vmatpush1.bf16.msra.mxu0 %v668
        %751 = vmatprep.subr.bf16.mxu0 0
        %752 = vmatpush1.bf16.msra.mxu0 %v665
        %753 = vmatprep.subr.bf16.mxu0 0
        %754 = vmatpush1.bf16.msra.mxu0 %v662
        %755 = vmatprep.subr.bf16.mxu0 0
        %756 = vmatpush1.bf16.msra.mxu0 %v659
        %757 = vmatprep.subr.bf16.mxu0 0
        %758 = vmatpush1.bf16.msra.mxu0 %v656
        %759 = vmatprep.subr.bf16.mxu0 0
        %760 = vmatpush2.bf16.msra.mxu0 0
        %761 = vmatprep.subr.bf16.mxu0 0
        %762 = vmatpush2.bf16.msra.mxu0 0
        %763 = vmatprep.subr.bf16.mxu0 0
        %764 = vmatpush2.bf16.msra.mxu0 0
        %765 = vmatprep.subr.bf16.mxu0 0
        %766 = vmatpush2.bf16.msra.mxu0 0
        %767 = vmatprep.subr.bf16.mxu0 0
        %768 = vmatpush2.bf16.msra.mxu0 0
        %769 = vmatprep.subr.bf16.mxu0 0
        %770 = vmatpush2.bf16.msra.mxu0 0
        %771 = vmatprep.subr.bf16.mxu0 0
        %772 = vmatpush2.bf16.msra.mxu0 0
        %773 = vmatprep.subr.bf16.mxu0 0
        %774 = vmatpush2.bf16.msra.mxu0 0
        %775 = vmatprep.mubr.bf16.mxu0 0
        %776 = vmatmul.mubr.bf16.gmra.mxu0 %v541
        %v777 = vpop.f32.mrf.mxu0
        %v778 = vadd.f32 0.0, %v777
        %v779 = vpop.f32.mrf.mxu0
        %v780 = vpop.f32.mrf.mxu0
        %v781 = vpop.f32.mrf.mxu0
        %782 = vdwg.mxu0
        %v783 = vadd.f32 %v538, %v737
        %v784 = vadd.f32 %v539, %v739
        %v785 = vadd.f32 %v540, %v778
        %786 = vst [vmem:[#allocation3] sm:$0xff] %v783
        %787 = vst [vmem:[#allocation3 + $0x8] sm:$0xff] %v784
        %788 = vst [vmem:[#allocation3 + $0x10] sm:$0xff] %v785
        %v789 = vld [vmem:[#allocation4] sm:$0xff]
        %v790 = vld [vmem:[#allocation4 + $0x8] sm:$0xff]
        %v791 = vld [vmem:[#allocation4 + $0x10] sm:$0xff]
        %v792 = vpack.c.bf16 %v537, %v537
        %v793 = vld [vmem:[#allocation14] sm:$0xff]
        %v794 = vld [vmem:[#allocation14 + $0x8] sm:$0xf]
        %v795 = vld [vmem:[#allocation14 + $0xc] sm:$0xff]
        %v796 = vld [vmem:[#allocation14 + $0x14] sm:$0xf]
        %v797 = vld [vmem:[#allocation14 + $0x18] sm:$0xff]
        %v798 = vld [vmem:[#allocation14 + $0x20] sm:$0xf]
        %v799 = vld [vmem:[#allocation14 + $0x24] sm:$0xff]
        %v800 = vld [vmem:[#allocation14 + $0x2c] sm:$0xf]
        %v801 = vld [vmem:[#allocation14 + $0x30] sm:$0xff]
        %v802 = vld [vmem:[#allocation14 + $0x38] sm:$0xf]
        %v803 = vld [vmem:[#allocation14 + $0x3c] sm:$0xff]
        %v804 = vld [vmem:[#allocation14 + $0x44] sm:$0xf]
        %v805 = vld [vmem:[#allocation14 + $0x48] sm:$0xff]
        %v806 = vld [vmem:[#allocation14 + $0x50] sm:$0xf]
        %v807 = vld [vmem:[#allocation14 + $0x54] sm:$0xff]
        %v808 = vld [vmem:[#allocation14 + $0x5c] sm:$0xf]
        %v809 = vld [vmem:[#allocation14 + $0x60] sm:$0xff]
        %v810 = vld [vmem:[#allocation14 + $0x68] sm:$0xf]
        %v811 = vld [vmem:[#allocation14 + $0x6c] sm:$0xff]
        %v812 = vld [vmem:[#allocation14 + $0x74] sm:$0xf]
        %v813 = vld [vmem:[#allocation14 + $0x78] sm:$0xff]
        %v814 = vld [vmem:[#allocation14 + $0x80] sm:$0xf]
        %v815 = vld [vmem:[#allocation14 + $0x84] sm:$0xff]
        %v816 = vld [vmem:[#allocation14 + $0x8c] sm:$0xf]
        %v817 = vld [vmem:[#allocation14 + $0x90] sm:$0xff]
        %v818 = vld [vmem:[#allocation14 + $0x98] sm:$0xf]
        %v819 = vld [vmem:[#allocation14 + $0x9c] sm:$0xff]
        %v820 = vld [vmem:[#allocation14 + $0xa4] sm:$0xf]
        %v821 = vld [vmem:[#allocation14 + $0xa8] sm:$0xff]
        %v822 = vld [vmem:[#allocation14 + $0xb0] sm:$0xf]
        %v823 = vld [vmem:[#allocation14 + $0xb4] sm:$0xff]
        %v824 = vld [vmem:[#allocation14 + $0xbc] sm:$0xf]
        %v857 = vunpack.c.l.b16 %v793
        %v858 = vunpack.c.h.b16 %v793
        %v859 = vunpack.c.l.b16 %v794
        %v860 = vunpack.c.l.b16 %v795
        %v861 = vunpack.c.h.b16 %v795
        %v862 = vunpack.c.l.b16 %v796
        %v863 = vunpack.c.l.b16 %v797
        %v864 = vunpack.c.h.b16 %v797
        %v865 = vunpack.c.l.b16 %v798
        %v866 = vunpack.c.l.b16 %v799
        %v867 = vunpack.c.h.b16 %v799
        %v868 = vunpack.c.l.b16 %v800
        %v869 = vunpack.c.l.b16 %v801
        %v870 = vunpack.c.h.b16 %v801
        %v871 = vunpack.c.l.b16 %v802
        %v872 = vunpack.c.l.b16 %v803
        %v873 = vunpack.c.h.b16 %v803
        %v874 = vunpack.c.l.b16 %v804
        %v875 = vunpack.c.l.b16 %v805
        %v876 = vunpack.c.h.b16 %v805
        %v877 = vunpack.c.l.b16 %v806
        %v878 = vunpack.c.l.b16 %v807
        %v879 = vunpack.c.h.b16 %v807
        %v880 = vunpack.c.l.b16 %v808
        %v881 = vunpack.c.l.b16 %v809
        %v882 = vunpack.c.h.b16 %v809
        %v883 = vunpack.c.l.b16 %v810
        %v884 = vunpack.c.l.b16 %v811
        %v885 = vunpack.c.h.b16 %v811
        %v886 = vunpack.c.l.b16 %v812
        %v887 = vunpack.c.l.b16 %v813
        %v888 = vunpack.c.h.b16 %v813
        %v889 = vunpack.c.l.b16 %v814
        %v890 = vunpack.c.l.b16 %v815
        %v891 = vunpack.c.h.b16 %v815
        %v892 = vunpack.c.l.b16 %v816
        %v893 = vunpack.c.l.b16 %v817
        %v894 = vunpack.c.h.b16 %v817
        %v895 = vunpack.c.l.b16 %v818
        %v896 = vunpack.c.l.b16 %v819
        %v897 = vunpack.c.h.b16 %v819
        %v898 = vunpack.c.l.b16 %v820
        %v899 = vunpack.c.l.b16 %v821
        %v900 = vunpack.c.h.b16 %v821
        %v901 = vunpack.c.l.b16 %v822
        %v902 = vunpack.c.l.b16 %v823
        %v903 = vunpack.c.h.b16 %v823
        %v904 = vunpack.c.l.b16 %v824
        %v905 = vpack.c.b16 %v860, %v857
        %v906 = vpack.c.b16 %v861, %v858
        %v907 = vpack.c.b16 %v862, %v859
        %v908 = vpack.c.b16 %v866, %v863
        %v909 = vpack.c.b16 %v867, %v864
        %v910 = vpack.c.b16 %v868, %v865
        %v911 = vpack.c.b16 %v872, %v869
        %v912 = vpack.c.b16 %v873, %v870
        %v913 = vpack.c.b16 %v874, %v871
        %v914 = vpack.c.b16 %v878, %v875
        %v915 = vpack.c.b16 %v879, %v876
        %v916 = vpack.c.b16 %v880, %v877
        %v917 = vpack.c.b16 %v884, %v881
        %v918 = vpack.c.b16 %v885, %v882
        %v919 = vpack.c.b16 %v886, %v883
        %v920 = vpack.c.b16 %v890, %v887
        %v921 = vpack.c.b16 %v891, %v888
        %v922 = vpack.c.b16 %v892, %v889
        %v923 = vpack.c.b16 %v896, %v893
        %v924 = vpack.c.b16 %v897, %v894
        %v925 = vpack.c.b16 %v898, %v895
        %v926 = vpack.c.b16 %v902, %v899
        %v927 = vpack.c.b16 %v903, %v900
        %v928 = vpack.c.b16 %v904, %v901
        %953 = vmatprep.subr.bf16.mxu0 %v927
        %954 = vmatpush1.bf16.msra.mxu0 %v926
        %955 = vmatprep.subr.bf16.mxu0 %v924
        %956 = vmatpush1.bf16.msra.mxu0 %v923
        %957 = vmatprep.subr.bf16.mxu0 %v921
        %958 = vmatpush1.bf16.msra.mxu0 %v920
        %959 = vmatprep.subr.bf16.mxu0 %v918
        %960 = vmatpush1.bf16.msra.mxu0 %v917
        %961 = vmatprep.subr.bf16.mxu0 %v915
        %962 = vmatpush1.bf16.msra.mxu0 %v914
        %963 = vmatprep.subr.bf16.mxu0 %v912
        %964 = vmatpush1.bf16.msra.mxu0 %v911
        %965 = vmatprep.subr.bf16.mxu0 %v909
        %966 = vmatpush1.bf16.msra.mxu0 %v908
        %967 = vmatprep.subr.bf16.mxu0 %v906
        %968 = vmatpush1.bf16.msra.mxu0 %v905
        %969 = vmatprep.subr.bf16.mxu0 0
        %970 = vmatpush2.bf16.msra.mxu0 0
        %971 = vmatprep.subr.bf16.mxu0 0
        %972 = vmatpush2.bf16.msra.mxu0 0
        %973 = vmatprep.subr.bf16.mxu0 0
        %974 = vmatpush2.bf16.msra.mxu0 0
        %975 = vmatprep.subr.bf16.mxu0 0
        %976 = vmatpush2.bf16.msra.mxu0 0
        %977 = vmatprep.subr.bf16.mxu0 0
        %978 = vmatpush2.bf16.msra.mxu0 0
        %979 = vmatprep.subr.bf16.mxu0 0
        %980 = vmatpush2.bf16.msra.mxu0 0
        %981 = vmatprep.subr.bf16.mxu0 0
        %982 = vmatpush2.bf16.msra.mxu0 0
        %983 = vmatprep.subr.bf16.mxu0 0
        %984 = vmatpush2.bf16.msra.mxu0 0
        %985 = vmatprep.mubr.bf16.mxu0 0
        %986 = vmatmul.mubr.bf16.gmra.mxu0 %v792
        %v987 = vpop.f32.mrf.mxu0
        %v988 = vadd.f32 0.0, %v987
        %v989 = vpop.f32.mrf.mxu0
        %v990 = vadd.f32 0.0, %v989
        %v991 = vpop.f32.mrf.mxu0
        %v992 = vpop.f32.mrf.mxu0
        %993 = vdwg.mxu0
        %994 = vmatprep.subr.bf16.mxu0 0
        %995 = vmatpush1.bf16.msra.mxu0 %v928
        %996 = vmatprep.subr.bf16.mxu0 0
        %997 = vmatpush1.bf16.msra.mxu0 %v925
        %998 = vmatprep.subr.bf16.mxu0 0
        %999 = vmatpush1.bf16.msra.mxu0 %v922
        %1000 = vmatprep.subr.bf16.mxu0 0
        %1001 = vmatpush1.bf16.msra.mxu0 %v919
        %1002 = vmatprep.subr.bf16.mxu0 0
        %1003 = vmatpush1.bf16.msra.mxu0 %v916
        %1004 = vmatprep.subr.bf16.mxu0 0
        %1005 = vmatpush1.bf16.msra.mxu0 %v913
        %1006 = vmatprep.subr.bf16.mxu0 0
        %1007 = vmatpush1.bf16.msra.mxu0 %v910
        %1008 = vmatprep.subr.bf16.mxu0 0
        %1009 = vmatpush1.bf16.msra.mxu0 %v907
        %1010 = vmatprep.subr.bf16.mxu0 0
        %1011 = vmatpush2.bf16.msra.mxu0 0
        %1012 = vmatprep.subr.bf16.mxu0 0
        %1013 = vmatpush2.bf16.msra.mxu0 0
        %1014 = vmatprep.subr.bf16.mxu0 0
        %1015 = vmatpush2.bf16.msra.mxu0 0
        %1016 = vmatprep.subr.bf16.mxu0 0
        %1017 = vmatpush2.bf16.msra.mxu0 0
        %1018 = vmatprep.subr.bf16.mxu0 0
        %1019 = vmatpush2.bf16.msra.mxu0 0
        %1020 = vmatprep.subr.bf16.mxu0 0
        %1021 = vmatpush2.bf16.msra.mxu0 0
        %1022 = vmatprep.subr.bf16.mxu0 0
        %1023 = vmatpush2.bf16.msra.mxu0 0
        %1024 = vmatprep.subr.bf16.mxu0 0
        %1025 = vmatpush2.bf16.msra.mxu0 0
        %1026 = vmatprep.mubr.bf16.mxu0 0
        %1027 = vmatmul.mubr.bf16.gmra.mxu0 %v792
        %v1028 = vpop.f32.mrf.mxu0
        %v1029 = vadd.f32 0.0, %v1028
        %v1030 = vpop.f32.mrf.mxu0
        %v1031 = vpop.f32.mrf.mxu0
        %v1032 = vpop.f32.mrf.mxu0
        %1033 = vdwg.mxu0
        %v1034 = vadd.f32 %v789, %v988
        %v1035 = vadd.f32 %v790, %v990
        %v1036 = vadd.f32 %v791, %v1029
        %1037 = vst [vmem:[#allocation4] sm:$0xff] %v1034
        %1038 = vst [vmem:[#allocation4 + $0x8] sm:$0xff] %v1035
        %1039 = vst [vmem:[#allocation4 + $0x10] sm:$0xff] %v1036
        // Predicated region
        $region93: #{tpu_custom_call.1} parent=63 // pred_check
          %p1040 = pneg %p456
        $region94: #{tpu_custom_call.1} parent=63 // pred_check_branch
          %1042 = sbr.rel (%p1040) target = $region96
        $region95: #{tpu_custom_call.1} parent=63 // pred_region
          %v1043 = vld [vmem:[#allocation15] sm:$0xff]
          %v1044 = vld [vmem:[#allocation3] sm:$0xff]
          %v1045 = vld [vmem:[#allocation3 + $0x8] sm:$0xff]
          %v1046 = vld [vmem:[#allocation3 + $0x10] sm:$0xff]
          %v1047 = vld [vmem:[%s8] sm:$0x7]
          %v1049 = vlaneseq
          %v1050 = vshrl.u32 %v1049, 7
          %v1051 = vsub.s32 0, %v1050
          %v1052 = vrot.slane %v1047, %v1051
          %v1053 = vlaneseq
          %v1054 = vshrl.u32 %v1053, 7
          %v1055 = vsub.s32 1, %v1054
          %v1056 = vrot.slane %v1047, %v1055
          %v1057 = vlaneseq
          %v1058 = vshrl.u32 %v1057, 7
          %v1059 = vsub.s32 2, %v1058
          %v1060 = vrot.slane %v1047, %v1059
          %v1064 = vadd.f32 %v1044, %v1052
          %v1065 = vadd.f32 %v1045, %v1056
          %v1066 = vadd.f32 %v1046, %v1060
          %v1067 = vld [vmem:[#allocation4] sm:$0xff]
          %v1068 = vld [vmem:[#allocation4 + $0x8] sm:$0xff]
          %v1069 = vld [vmem:[#allocation4 + $0x10] sm:$0xff]
          %v1070 = vld [vmem:[%s9] sm:$0x7]
          %v1072 = vlaneseq
          %v1073 = vshrl.u32 %v1072, 7
          %v1074 = vsub.s32 0, %v1073
          %v1075 = vrot.slane %v1070, %v1074
          %v1076 = vlaneseq
          %v1077 = vshrl.u32 %v1076, 7
          %v1078 = vsub.s32 1, %v1077
          %v1079 = vrot.slane %v1070, %v1078
          %v1080 = vlaneseq
          %v1081 = vshrl.u32 %v1080, 7
          %v1082 = vsub.s32 2, %v1081
          %v1083 = vrot.slane %v1070, %v1082
          %v1087 = vadd.f32 %v1067, %v1075
          %v1088 = vadd.f32 %v1068, %v1079
          %v1089 = vadd.f32 %v1069, %v1083
          %v1090 = vadd.f32 %v1064, %v1087
          %v1091 = vxor.u32 %v1090, 2147483648
          %v1092 = vmul.f32 %v1091, 1.442695
          %v1093 = vpow.pop %v1092
          %v1094 = vadd.f32 %v1093, 1.0
          %v1095 = vrcp.pop %v1094
          %v1096 = vmul.f32 1.0, %v1095
          %v1097 = vadd.f32 %v1065, %v1088
          %v1098 = vxor.u32 %v1097, 2147483648
          %v1099 = vmul.f32 %v1098, 1.442695
          %v1100 = vpow.pop %v1099
          %v1101 = vadd.f32 %v1100, 1.0
          %v1102 = vrcp.pop %v1101
          %v1103 = vmul.f32 1.0, %v1102
          %v1104 = vmul.f32 %v1096, %v1089
          %v1105 = vadd.f32 %v1066, %v1104
          %v1106 = vtanh.pop %v1105
          %v1107 = vsub.f32 1.0, %v1103
          %v1108 = vmul.f32 %v1107, %v1106
          %v1109 = vmul.f32 %v1103, %v1043
          %v1110 = vadd.f32 %v1108, %v1109
          %v1111 = vld [vmem:[#allocation5] sm:$0x1]
          %v1113 = vlaneseq
          %v1114 = vshrl.u32 %v1113, 7
          %v1115 = vsub.s32 0, %v1114
          %v1116 = vrot.slane %v1111, %v1115
          %1117 = vset.pattern.permute.xlu0 0
          %1118 = vperm.xlu0 %1117, %v1116
          %v1119 = vpop.permute.xlu0 %1118
          %v1121 = vmul.f32 %v1110, %v1119
          %v1122 = vadd.f32 %v1121, %v1043
          %v1123 = vmax.f32 %v1122, 0.0
          %1124 = vst [vmem:[#allocation15] sm:$0xff] %v1123
        $region96: #{tpu_custom_call.1} parent=63 // pred_fallthru
          _
        // Predicated region
        $region97: #{tpu_custom_call.1} parent=63 // pred_check
          %p1125 = pneg %p294
        $region98: #{tpu_custom_call.1} parent=63 // pred_check_branch
          %1127 = sbr.rel (%p1125) target = $region100
        $region99: #{tpu_custom_call.1} parent=63 // pred_region
          %s1129 = ssub.s32 128, 128
          %1130 = vsyncadd [#allocation8], %s1129
          %s1132 = sshll.u32 [#allocation15], 4
          %s1133 = int_to_ptr.vmem [resolvable:$true] %s1132
          %1135 = dma.vmem_to_hbm [thread:$0]  %s1133, 128, %s11, [#allocation8]
        $region100: #{tpu_custom_call.1} parent=63 // pred_fallthru
          _
        // Predicated region
        $region101: #{tpu_custom_call.1} parent=63 // pred_check
          %p1136 = pneg %p294
        $region102: #{tpu_custom_call.1} parent=63 // pred_check_branch
          %1138 = sbr.rel (%p1136) target = $region104
        $region103: #{tpu_custom_call.1} parent=63 // pred_region
          %1139 = dma.done [#allocation8], 128
        $region104: #{tpu_custom_call.1} parent=63 // pred_fallthru
          _
      $region64: #{tpu_custom_call.1} parent=5 // pred_fallthru
        _
      %p1140 = scmp.le.s32.totalorder 2, %s23
      // Predicated region
      $region105: #{tpu_custom_call.1} parent=5 // pred_check
        %p1141 = pneg %p1140
      $region106: #{tpu_custom_call.1} parent=5 // pred_check_branch
        %1143 = sbr.rel (%p1141) target = $region108
      $region107: #{tpu_custom_call.1} parent=5 // pred_region
        %s1144 = ssub.s32 %s23, 2
      $region108: #{tpu_custom_call.1} parent=5 // pred_fallthru
        _
    $region6: #{tpu_custom_call.1} parent=1 // loop_footer
      %s27 = sadd.s32 1, %s23
    $region7: #{tpu_custom_call.1} parent=1 // loop_footer_branch
      %22 = sbr.rel target = $region3
    $region8: #{tpu_custom_call.1} parent=1 // loop_exit
      _
    %1145 = vsyncpa [#allocation7], 1
    %s1146 = scalar_lea.sflag [#allocation7], 1
    %1147 = vsyncpa %s1146, 1
    %1148 = vsyncpa [#allocation10], 1
    %1149 = vsyncpa [#allocation13], 1
    %1150 = vsyncpa [#allocation8], 1
    %s1151 = scalar_lea.sflag [#allocation8], 1
    %1152 = vsyncpa %s1151, 1

</llo_original>
